<compile_context>
chip_gen: v5e
topology: v5e:2x2
jax: 0.10.0
libtpu: 0.0.40
codegen_flags: <defaults>
</compile_context>

<pallas_src>
import functools
import math

import jax
import jax.numpy as jnp
from jax.experimental import pallas as pl
from jax.experimental.pallas import tpu as pltpu

_INV_SQRT2 = 1.0 / math.sqrt(2.0)


def _cdiv(a, b):
    return -(-a // b)


def _round_up(a, m):
    return _cdiv(a, m) * m


def _gelu(h, approximate):
    if approximate:
        # tanh routes to the otherwise-idle EUP slot, freeing VALU slots.
        return jax.nn.gelu(h, approximate=True)
    # Exact erf-based GELU, matching torch.nn.GELU() default.
    return 0.5 * h * (1.0 + jax.lax.erf(h * _INV_SQRT2))


# --------------------------------------------------------------------------
# Kernel bodies
# --------------------------------------------------------------------------
def _ffn_kernel_full(x_ref, w1_ref, b1_ref, w2_ref, b2_ref, o_ref, *, approximate):
    """GELU(x @ W1 + b1) @ W2 + b2 with both weight matrices VMEM-resident."""
    h = jnp.dot(x_ref[...], w1_ref[...], preferred_element_type=jnp.float32)
    h = h + b1_ref[...].astype(jnp.float32)
    h = _gelu(h, approximate)
    out = jnp.dot(h.astype(w2_ref.dtype), w2_ref[...],
                  preferred_element_type=jnp.float32)
    o_ref[...] = (out + b2_ref[...].astype(jnp.float32)).astype(o_ref.dtype)


def _ffn_kernel_chunked(x_ref, w1_ref, b1_ref, w2_ref, b2_ref, o_ref, acc_ref,
                        *, approximate):
    """One (row-tile, hidden-chunk) step with a resident f32 accumulator."""
    j = pl.program_id(1)

    @pl.when(j == 0)
    def _():
        # Fold b2 into the accumulator init (drops a (tr, D) add from the epilogue).
        acc_ref[...] = jnp.broadcast_to(b2_ref[...].astype(jnp.float32),
                                        acc_ref.shape)

    h = jnp.dot(x_ref[...], w1_ref[...], preferred_element_type=jnp.float32)
    h = h + b1_ref[...].astype(jnp.float32)
    h = _gelu(h, approximate)
    acc_ref[...] += jnp.dot(h.astype(w2_ref.dtype), w2_ref[...],
                            preferred_element_type=jnp.float32)

    @pl.when(j == pl.num_programs(1) - 1)
    def _():
        o_ref[...] = acc_ref[...].astype(o_ref.dtype)


# --------------------------------------------------------------------------
# Wrapper
# --------------------------------------------------------------------------
def _vmem_capacity_bytes():
    """Per-TensorCore VMEM capacity; conservative 64 MiB fallback (v7x)."""
    try:
        info = pltpu.get_tpu_info()
        cap = getattr(info, "vmem_capacity_bytes", None)
        if cap:
            return int(cap)
    except Exception:
        pass
    return 64 * 1024 * 1024


def feed_forward(x, w1, b1, w2, b2, *, tile_rows=256, tile_h=None,
                 weight_dtype=jnp.bfloat16, gelu_approximate=False):
    """Fused ViT FeedForward:  GELU(x @ W1 + b1) @ W2 + b2.

    x: (B, S, D); w1: (D, H); b1: (H,); w2: (H, D); b2: (D,).
    weight_dtype:     dtype for the MXU operands (x, W1, W2); default bf16.
                      Accumulation and GELU are f32; output keeps x's dtype.
                      Pass None to keep f32 operands (bit-tight numerics).
    tile_h:           optional explicit hidden chunk (128-multiple dividing H).
                      If None, the kernel keeps the full weights VMEM-resident
                      when they fit the queried budget, otherwise auto-picks a
                      256-aligned chunk (2x256^2 MXU on v6e/v7x).
    gelu_approximate: use tanh-approximate GELU instead of erf-exact.
    """
    B, S, D = x.shape
    H = w1.shape[1]
    out_dtype = x.dtype

    if weight_dtype is not None:
        x = x.astype(weight_dtype)
        w1 = w1.astype(weight_dtype)
        w2 = w2.astype(weight_dtype)

    rows = B * S
    x2d = x.reshape(rows, D)
    b1_2d = b1.reshape(1, H)
    b2_2d = b2.reshape(1, D)

    itm_x = jnp.dtype(x2d.dtype).itemsize
    itm_w = jnp.dtype(w1.dtype).itemsize
    itm_b = jnp.dtype(b1.dtype).itemsize
    itm_o = jnp.dtype(out_dtype).itemsize

    # ---- Row tiling: balanced tiles (even count helps v7x megacore), no
    # wrapper-side pad/slice — Pallas masks the ragged last block and rows are
    # independent, so undefined pad rows cannot contaminate valid output.
    n_row_tiles = max(1, _cdiv(rows, max(8, int(tile_rows))))
    if n_row_tiles == 1:
        tr = rows                       # single full block (no (8,128) issue)
    else:
        tr = _round_up(_cdiv(rows, n_row_tiles), 8)
    grid_rows = _cdiv(rows, tr)

    # ---- VMEM budget derived from the queried per-core capacity.
    vmem_cap = _vmem_capacity_bytes()
    budget = (vmem_cap * 3) // 4        # headroom for compiler-internal scratch

    def _vmem_need(th, chunked):
        need = 2 * tr * D * itm_x                                   # x tiles (2-buf)
        need += 2 * (D * th + th * D) * itm_w                       # W1/W2 (2-buf)
        need += 2 * (_round_up(th, 128) + _round_up(D, 128)) * itm_b
        need += 2 * tr * D * itm_o                                  # out tiles
        need += tr * th * 4                                         # f32 GELU tile
        if chunked:
            need += tr * D * 4                                      # f32 accumulator
        return need

    # ---- Hidden-dim tile selection.
    if tile_h is not None:
        th = int(tile_h)
        if th >= H:
            th = H
        elif H % th != 0 or th % 128 != 0:
            raise ValueError(
                f"tile_h={tile_h} must be a 128-multiple that divides H={H}")
    elif H < 512 or _vmem_need(H, chunked=False) <= budget:
        th = H                          # full residency: weights DMA'd once
    else:
        th = None
        fallback = None
        for mult in (256, 128):         # prefer MXU-aligned 256-multiples
            if H % mult:
                continue
            cands = [c for c in range(mult, H, mult) if H % c == 0]
            if not cands:
                continue
            fitting = [c for c in cands if _vmem_need(c, chunked=True) <= budget]
            if fitting:
                th = max(fitting)
                break
            if fallback is None:
                fallback = min(cands)
        if th is None:
            th = fallback if fallback is not None else H

    # ---- Grid / specs.
    if th == H:
        grid = (grid_rows,)
        kernel = functools.partial(_ffn_kernel_full, approximate=gelu_approximate)
        in_specs = [
            pl.BlockSpec((tr, D), lambda i: (i, 0)),   # x row tile
            pl.BlockSpec((D, H), lambda i: (0, 0)),    # W1 (resident, DMA'd once)
            pl.BlockSpec((1, H), lambda i: (0, 0)),    # b1
            pl.BlockSpec((H, D), lambda i: (0, 0)),    # W2 (resident, DMA'd once)
            pl.BlockSpec((1, D), lambda i: (0, 0)),    # b2
        ]
        out_spec = pl.BlockSpec((tr, D), lambda i: (i, 0))
        scratch_shapes = []
        dim_sem = ("parallel",)
        weight_passes = 1
        need = _vmem_need(H, chunked=False)
    else:
        grid = (grid_rows, H // th)     # reduction (hidden) axis last
        kernel = functools.partial(_ffn_kernel_chunked, approximate=gelu_approximate)
        in_specs = [
            pl.BlockSpec((tr, D), lambda i, j: (i, 0)),   # x row tile
            pl.BlockSpec((D, th), lambda i, j: (0, j)),   # W1 hidden chunk
            pl.BlockSpec((1, th), lambda i, j: (0, j)),   # b1 hidden chunk
            pl.BlockSpec((th, D), lambda i, j: (j, 0)),   # W2 hidden chunk
            pl.BlockSpec((1, D), lambda i, j: (0, 0)),    # b2
        ]
        out_spec = pl.BlockSpec((tr, D), lambda i, j: (i, 0))
        scratch_shapes = [pltpu.VMEM((tr, D), jnp.float32)]
        dim_sem = ("parallel", "arbitrary")
        weight_passes = grid_rows       # weight chunks re-streamed per row tile
        need = _vmem_need(th, chunked=True)

    # Never request more VMEM than physical capacity minus headroom
    # (v7x: <= 56 MiB of the 64 MiB per TensorCore).
    hard_cap = (vmem_cap * 7) // 8
    vmem_limit = int(min(hard_cap, max(32 * 1024 * 1024, need + (4 << 20))))

    compute_rows = grid_rows * tr       # includes masked rows of the ragged block
    cost = pl.CostEstimate(
        flops=int(2 * compute_rows * D * H * 2),
        transcendentals=int(compute_rows * H),
        bytes_accessed=int(rows * D * itm_x + rows * D * itm_o
                           + weight_passes * (w1.size + w2.size) * itm_w
                           + b1_2d.size * itm_b + b2_2d.size * itm_b),
    )

    out2d = pl.pallas_call(
        kernel,
        out_shape=jax.ShapeDtypeStruct((rows, D), out_dtype),
        grid_spec=pltpu.PrefetchScalarGridSpec(
            num_scalar_prefetch=0,
            grid=grid,
            in_specs=in_specs,
            out_specs=out_spec,
            scratch_shapes=scratch_shapes,
        ),
        compiler_params=pltpu.CompilerParams(
            dimension_semantics=dim_sem,
            vmem_limit_bytes=vmem_limit,
        ),
        cost_estimate=cost,
    )(x2d, w1, b1_2d, w2, b2_2d)

    return out2d.reshape(B, S, D)


# --------------------------------------------------------------------------
# Reference + tests
# --------------------------------------------------------------------------
def _init_linear(key, fan_in, fan_out, dtype=jnp.float32):
    """Deterministic init mimicking torch.nn.Linear defaults (Kaiming-uniform)."""
    kw, kb = jax.random.split(key)
    bound = 1.0 / math.sqrt(fan_in)
    w = jax.random.uniform(kw, (fan_in, fan_out), dtype, -bound, bound)
    b = jax.random.uniform(kb, (fan_out,), dtype, -bound, bound)
    return w, b


def _ffn_reference(x, w1, b1, w2, b2):
    hp = jax.lax.Precision.HIGHEST
    h = jnp.dot(x, w1, precision=hp) + b1
    h = jax.nn.gelu(h, approximate=False)
    return jnp.dot(h, w2, precision=hp) + b2


if __name__ == "__main__":
    key = jax.random.PRNGKey(0)
    kx, k1, k2, kx2, k3, k4 = jax.random.split(key, 6)

    # --- Test 1: lane-aligned ViT-style dims (17 tokens = 16 patches + CLS) ---
    B, S, D, HID = 2, 17, 128, 512
    x = jax.random.normal(kx, (B, S, D), jnp.float32)
    w1, b1 = _init_linear(k1, D, HID)
    w2, b2 = _init_linear(k2, HID, D)
    ref = _ffn_reference(x, w1, b1, w2, b2)

    # f32 operands, full weight residency (auto th=H): tight tolerance.
    out_f32 = jax.block_until_ready(
        feed_forward(x, w1, b1, w2, b2, weight_dtype=None))
    assert out_f32.shape == (B, S, D)
    assert jnp.allclose(out_f32, ref, atol=1e-3, rtol=1e-3), "f32 full FFN mismatch"

    # f32 operands, explicit 256-wide hidden chunks (accumulator/reduction path).
    out_f32_c = jax.block_until_ready(
        feed_forward(x, w1, b1, w2, b2, weight_dtype=None, tile_h=256))
    assert jnp.allclose(out_f32_c, ref, atol=1e-3, rtol=1e-3), "f32 chunked FFN mismatch"

    # Default path: bf16 MXU operands, f32 accumulation.
    out_bf16 = jax.block_until_ready(feed_forward(x, w1, b1, w2, b2))
    assert out_bf16.dtype == x.dtype
    assert jnp.allclose(out_bf16, ref, atol=5e-2, rtol=5e-2), "bf16 FFN mismatch"

    # tanh-approximate GELU (EUP) path.
    out_tanh = jax.block_until_ready(
        feed_forward(x, w1, b1, w2, b2, weight_dtype=None, gelu_approximate=True))
    assert jnp.allclose(out_tanh, ref, atol=1e-2, rtol=1e-2), "tanh-GELU FFN mismatch"

    # --- Test 2: small non-aligned dims, multiple row tiles with a ragged last
    #     block (no wrapper pad/slice; Pallas masks the boundary stores) ---
    B2, S2, D2, H2 = 2, 7, 32, 64
    x2 = jax.random.normal(kx2, (B2, S2, D2), jnp.float32)
    w1b, b1b = _init_linear(k3, D2, H2)
    w2b, b2b = _init_linear(k4, H2, D2)
    out2 = jax.block_until_ready(
        feed_forward(x2, w1b, b1b, w2b, b2b, weight_dtype=None, tile_rows=8))
    ref2 = _ffn_reference(x2, w1b, b1b, w2b, b2b)
    assert out2.shape == (B2, S2, D2)
    assert jnp.allclose(out2, ref2, atol=1e-3, rtol=1e-3), "ragged-rows FFN mismatch"

    print("KERNEL_OK")
</pallas_src>

<mosaic_0001>
module attributes {stable_mosaic.version = 11 : i64} {
  func.func @_ffn_kernel_full(%arg0: i32, %arg1: memref<34x128xf32, #tpu.memory_space<vmem>>, %arg2: memref<128x512xf32, #tpu.memory_space<vmem>>, %arg3: memref<1x512xf32, #tpu.memory_space<vmem>>, %arg4: memref<512x128xf32, #tpu.memory_space<vmem>>, %arg5: memref<1x128xf32, #tpu.memory_space<vmem>>, %arg6: memref<34x128xf32, #tpu.memory_space<vmem>>) attributes {dimension_semantics = [#tpu.dimension_semantics<parallel>], iteration_bounds = array<i64: 1>, scalar_prefetch = 0 : i64, scratch_operands = 0 : i64, tpu.core_type = #tpu.core_type<tc>, window_params = [{transform_indices = @transform_0, window_bounds = array<i64: 34, 128>}, {pipeline_mode = #tpu.pipeline_mode<synchronous>, transform_indices = @transform_1, window_bounds = array<i64: 128, 512>}, {pipeline_mode = #tpu.pipeline_mode<synchronous>, transform_indices = @transform_2, window_bounds = array<i64: 1, 512>}, {pipeline_mode = #tpu.pipeline_mode<synchronous>, transform_indices = @transform_3, window_bounds = array<i64: 512, 128>}, {pipeline_mode = #tpu.pipeline_mode<synchronous>, transform_indices = @transform_4, window_bounds = array<i64: 1, 128>}, {transform_indices = @transform_5, window_bounds = array<i64: 34, 128>}]} {
    %c0 = arith.constant 0 : index
    %c0_0 = arith.constant 0 : index
    %0 = vector.load %arg1[%c0, %c0_0] : memref<34x128xf32, #tpu.memory_space<vmem>>, vector<34x128xf32>
    %c0_1 = arith.constant 0 : index
    %c0_2 = arith.constant 0 : index
    %1 = vector.load %arg2[%c0_1, %c0_2] : memref<128x512xf32, #tpu.memory_space<vmem>>, vector<128x512xf32>
    %cst = arith.constant dense<0.000000e+00> : vector<34x512xf32>
    %2 = tpu.matmul %0, %1, %cst {dimension_numbers = #tpu.dot_dimension_numbers<[1], [0], [0], [1], [0, 0, 1, 1], [], []>} : vector<34x128xf32>, vector<128x512xf32>, vector<34x512xf32> -> vector<34x512xf32>
    %c0_3 = arith.constant 0 : index
    %c0_4 = arith.constant 0 : index
    %3 = vector.load %arg3[%c0_3, %c0_4] : memref<1x512xf32, #tpu.memory_space<vmem>>, vector<1x512xf32>
    %4 = vector.broadcast %3 : vector<1x512xf32> to vector<34x512xf32>
    %5 = arith.addf %2, %4 : vector<34x512xf32>
    %cst_5 = arith.constant 5.000000e-01 : f32
    %6 = vector.broadcast %cst_5 : f32 to vector<34x512xf32>
    %7 = arith.mulf %6, %5 : vector<34x512xf32>
    %cst_6 = arith.constant 0.707106769 : f32
    %8 = vector.broadcast %cst_6 : f32 to vector<34x512xf32>
    %9 = arith.mulf %5, %8 : vector<34x512xf32>
    %10 = math.erf %9 : vector<34x512xf32>
    %cst_7 = arith.constant 1.000000e+00 : f32
    %11 = vector.broadcast %cst_7 : f32 to vector<34x512xf32>
    %12 = arith.addf %11, %10 : vector<34x512xf32>
    %13 = arith.mulf %7, %12 : vector<34x512xf32>
    %c0_8 = arith.constant 0 : index
    %c0_9 = arith.constant 0 : index
    %14 = vector.load %arg4[%c0_8, %c0_9] : memref<512x128xf32, #tpu.memory_space<vmem>>, vector<512x128xf32>
    %cst_10 = arith.constant dense<0.000000e+00> : vector<34x128xf32>
    %15 = tpu.matmul %13, %14, %cst_10 {dimension_numbers = #tpu.dot_dimension_numbers<[1], [0], [0], [1], [0, 0, 1, 1], [], []>} : vector<34x512xf32>, vector<512x128xf32>, vector<34x128xf32> -> vector<34x128xf32>
    %c0_11 = arith.constant 0 : index
    %c0_12 = arith.constant 0 : index
    %16 = vector.load %arg5[%c0_11, %c0_12] : memref<1x128xf32, #tpu.memory_space<vmem>>, vector<1x128xf32>
    %17 = vector.broadcast %16 : vector<1x128xf32> to vector<34x128xf32>
    %18 = arith.addf %15, %17 : vector<34x128xf32>
    %c0_13 = arith.constant 0 : index
    %c0_14 = arith.constant 0 : index
    %19 = vector.load %arg6[%c0_13, %c0_14] : memref<34x128xf32, #tpu.memory_space<vmem>>, vector<34x128xf32>
    tpu.vector_store %arg6[%c0_13, %c0_14], %18 {strides = array<i32>} : memref<34x128xf32, #tpu.memory_space<vmem>>, vector<34x128xf32>,
    return
  }
  func.func @transform_0(%arg0: i32) -> (i32, i32) {
    %c0_i32 = arith.constant 0 : i32
    %c0_i32_0 = arith.constant 0 : i32
    return %arg0, %c0_i32 : i32, i32
  }
  func.func @transform_1(%arg0: i32) -> (i32, i32) {
    %c0_i32 = arith.constant 0 : i32
    %c0_i32_0 = arith.constant 0 : i32
    %c0_i32_1 = arith.constant 0 : i32
    return %c0_i32, %c0_i32_0 : i32, i32
  }
  func.func @transform_2(%arg0: i32) -> (i32, i32) {
    %c0_i32 = arith.constant 0 : i32
    %c0_i32_0 = arith.constant 0 : i32
    %c0_i32_1 = arith.constant 0 : i32
    return %c0_i32, %c0_i32_0 : i32, i32
  }
  func.func @transform_3(%arg0: i32) -> (i32, i32) {
    %c0_i32 = arith.constant 0 : i32
    %c0_i32_0 = arith.constant 0 : i32
    %c0_i32_1 = arith.constant 0 : i32
    return %c0_i32, %c0_i32_0 : i32, i32
  }
  func.func @transform_4(%arg0: i32) -> (i32, i32) {
    %c0_i32 = arith.constant 0 : i32
    %c0_i32_0 = arith.constant 0 : i32
    %c0_i32_1 = arith.constant 0 : i32
    return %c0_i32, %c0_i32_0 : i32, i32
  }
  func.func @transform_5(%arg0: i32) -> (i32, i32) {
    %c0_i32 = arith.constant 0 : i32
    %c0_i32_0 = arith.constant 0 : i32
    return %arg0, %c0_i32 : i32, i32
  }
}

</mosaic_0001>

<llo_original>
// kernel: tpu_custom_call.1
$region0: #{tpu_custom_call.1}
  #allocation0 [shape = 'u32[]', space=smem, size = 0x4, offset = 0x4, fixed_abs, tag = 'smem constant byte address 0x4 - core index']
  #allocation1 [shape = 'u32[72,128]{1,0:T(1,128)}', space=vmem, size = 0x9000, scoped, tag = 'internal scratch']
  %s0 = inlined_call_operand.hbm [shape: f32[34,128], index: 0, kind: input, shape index: {}]
  %s1 = inlined_call_operand.hbm [shape: f32[128,512], index: 1, kind: input, shape index: {}]
  %s2 = inlined_call_operand.hbm [shape: f32[1,512], index: 2, kind: input, shape index: {}]
  %s3 = inlined_call_operand.hbm [shape: f32[512,128], index: 3, kind: input, shape index: {}]
  %s4 = inlined_call_operand.vmem [shape: f32[1,128], index: 4, kind: input, shape index: {}]
  %s5 = inlined_call_operand.hbm [shape: f32[34,128], index: 5, kind: output, shape index: {}]
  %s6 = sld [smem:[#allocation0]]
  $region46: #{tpu_custom_call.1} parent=0
    _
  %s8 = ssub.s32 1, %s6
  %s9 = scalar_select 0, %s8, %s6
  $region1: #{tpu_custom_call.1} parent=0
    #allocation2 [shape = 'u8[20480]{0}', space=vmem, size = 0x5000, scoped, tag = 'input window, operand 0, single buffered']
    #allocation3 [shape = 's32[1]{0}', space=sflag, size = 0x4, scoped, tag = 'scoped memory for tpu_custom_call.1']
    #allocation4 [shape = 's32[1]{0}', space=sflag, size = 0x4, scoped, tag = 'scoped memory for tpu_custom_call.1']
    #allocation5 [shape = 'u8[262144]{0}', space=vmem, size = 0x40000, scoped, tag = 'input window, operand 1, single buffered']
    #allocation6 [shape = 's32[1]{0}', space=sflag, size = 0x4, scoped, tag = 'scoped memory for tpu_custom_call.1']
    #allocation7 [shape = 'u8[2048]{0}', space=vmem, size = 0x800, scoped, tag = 'input window, operand 2, single buffered']
    #allocation8 [shape = 'u8[262144]{0}', space=vmem, size = 0x40000, scoped, tag = 'input window, operand 3, single buffered']
    #allocation9 [shape = 's32[1]{0}', space=sflag, size = 0x4, scoped, tag = 'scoped memory for tpu_custom_call.1']
    #allocation10 [shape = 'u8[20480]{0}', space=vmem, size = 0x5000, scoped, tag = 'output window, operand 0, single buffered']
    %10 = vsyncpa [#allocation3], 0
    %11 = vsyncpa [#allocation6], 0
    %12 = vsyncpa [#allocation9], 0
    %13 = vsyncpa [#allocation4], 0
    // Predicated region
    $region2: #{tpu_custom_call.1} parent=1 // pred_check
      _
    $region3: #{tpu_custom_call.1} parent=1 // pred_check_branch
      %15 = sbr.rel (0) target = $region5
    $region4: #{tpu_custom_call.1} parent=1 // pred_region
      %17 = vsyncadd [#allocation3], 0
      %s18 = sshll.u32 %s0, 4
      %s19 = int_to_ptr.hbm [resolvable:$true] %s18
      %s20 = sshll.u32 [#allocation2], 4
      %s21 = int_to_ptr.vmem [resolvable:$true] %s20
      %26 = dma.hbm_to_vmem [thread:$0]  %s19, 640, %s21, [#allocation3], 128, 128, 8
    $region5: #{tpu_custom_call.1} parent=1 // pred_fallthru
      _
    // Predicated region
    $region6: #{tpu_custom_call.1} parent=1 // pred_check
      _
    $region7: #{tpu_custom_call.1} parent=1 // pred_check_branch
      %28 = sbr.rel (0) target = $region9
    $region8: #{tpu_custom_call.1} parent=1 // pred_region
      %30 = vsyncadd [#allocation6], 0
      %s31 = sshll.u32 %s1, 4
      %s32 = int_to_ptr.hbm [resolvable:$true] %s31
      %s33 = sshll.u32 [#allocation5], 4
      %s34 = int_to_ptr.vmem [resolvable:$true] %s33
      %39 = dma.hbm_to_vmem [thread:$0]  %s32, 8192, %s34, [#allocation6], 512, 512, 32
    $region9: #{tpu_custom_call.1} parent=1 // pred_fallthru
      _
    // Predicated region
    $region10: #{tpu_custom_call.1} parent=1 // pred_check
      _
    $region11: #{tpu_custom_call.1} parent=1 // pred_check_branch
      %41 = sbr.rel (0) target = $region13
    $region12: #{tpu_custom_call.1} parent=1 // pred_region
      %43 = vsyncadd [#allocation6], 0
      %s45 = sshll.u32 %s2, 4
      %s46 = int_to_ptr.hbm [resolvable:$true] %s45
      %s47 = sshll.u32 [#allocation7], 4
      %s48 = int_to_ptr.vmem [resolvable:$true] %s47
      %50 = dma.hbm_to_vmem [thread:$0]  %s46, 64, %s48, [#allocation6]
    $region13: #{tpu_custom_call.1} parent=1 // pred_fallthru
      _
    // Predicated region
    $region14: #{tpu_custom_call.1} parent=1 // pred_check
      _
    $region15: #{tpu_custom_call.1} parent=1 // pred_check_branch
      %52 = sbr.rel (0) target = $region17
    $region16: #{tpu_custom_call.1} parent=1 // pred_region
      %54 = vsyncadd [#allocation9], 0
      %s55 = sshll.u32 %s3, 4
      %s56 = int_to_ptr.hbm [resolvable:$true] %s55
      %s57 = sshll.u32 [#allocation8], 4
      %s58 = int_to_ptr.vmem [resolvable:$true] %s57
      %63 = dma.hbm_to_vmem [thread:$0]  %s56, 8192, %s58, [#allocation9], 128, 128, 8
    $region17: #{tpu_custom_call.1} parent=1 // pred_fallthru
      _
    // Predicated region
    $region18: #{tpu_custom_call.1} parent=1 // pred_check
      _
    $region19: #{tpu_custom_call.1} parent=1 // pred_check_branch
      %65 = sbr.rel (0) target = $region21
    $region20: #{tpu_custom_call.1} parent=1 // pred_region
      _
    $region21: #{tpu_custom_call.1} parent=1 // pred_fallthru
      _
    // Predicated region
    $region22: #{tpu_custom_call.1} parent=1 // pred_check
      _
    $region23: #{tpu_custom_call.1} parent=1 // pred_check_branch
      %67 = sbr.rel (0) target = $region25
    $region24: #{tpu_custom_call.1} parent=1 // pred_region
      %69 = dma.done [#allocation3], 640
    $region25: #{tpu_custom_call.1} parent=1 // pred_fallthru
      _
    // Predicated region
    $region26: #{tpu_custom_call.1} parent=1 // pred_check
      _
    $region27: #{tpu_custom_call.1} parent=1 // pred_check_branch
      %71 = sbr.rel (0) target = $region29
    $region28: #{tpu_custom_call.1} parent=1 // pred_region
      %73 = dma.done [#allocation6], 8192
    $region29: #{tpu_custom_call.1} parent=1 // pred_fallthru
      _
    // Predicated region
    $region30: #{tpu_custom_call.1} parent=1 // pred_check
      _
    $region31: #{tpu_custom_call.1} parent=1 // pred_check_branch
      %75 = sbr.rel (0) target = $region33
    $region32: #{tpu_custom_call.1} parent=1 // pred_region
      %77 = dma.done [#allocation6], 64
    $region33: #{tpu_custom_call.1} parent=1 // pred_fallthru
      _
    // Predicated region
    $region34: #{tpu_custom_call.1} parent=1 // pred_check
      _
    $region35: #{tpu_custom_call.1} parent=1 // pred_check_branch
      %79 = sbr.rel (0) target = $region37
    $region36: #{tpu_custom_call.1} parent=1 // pred_region
      %81 = dma.done [#allocation9], 8192
    $region37: #{tpu_custom_call.1} parent=1 // pred_fallthru
      _
    %v82 = vld [vmem:[#allocation2] sm:$0xff]
    %v83 = vld [vmem:[#allocation2 + $0x8] sm:$0xff]
    %v84 = vld [vmem:[#allocation2 + $0x10] sm:$0xff]
    %v85 = vld [vmem:[#allocation2 + $0x18] sm:$0xff]
    %v86 = vld [vmem:[#allocation2 + $0x20] sm:$0x3]
    %v87 = vld [vmem:[#allocation5] sm:$0xff]
    %v88 = vld [vmem:[#allocation5 + $0x8] sm:$0xff]
    %v89 = vld [vmem:[#allocation5 + $0x10] sm:$0xff]
    %v90 = vld [vmem:[#allocation5 + $0x18] sm:$0xff]
    %v91 = vld [vmem:[#allocation5 + $0x20] sm:$0xff]
    %v92 = vld [vmem:[#allocation5 + $0x28] sm:$0xff]
    %v93 = vld [vmem:[#allocation5 + $0x30] sm:$0xff]
    %v94 = vld [vmem:[#allocation5 + $0x38] sm:$0xff]
    %v95 = vld [vmem:[#allocation5 + $0x40] sm:$0xff]
    %v96 = vld [vmem:[#allocation5 + $0x48] sm:$0xff]
    %v97 = vld [vmem:[#allocation5 + $0x50] sm:$0xff]
    %v98 = vld [vmem:[#allocation5 + $0x58] sm:$0xff]
    %v99 = vld [vmem:[#allocation5 + $0x60] sm:$0xff]
    %v100 = vld [vmem:[#allocation5 + $0x68] sm:$0xff]
    %v101 = vld [vmem:[#allocation5 + $0x70] sm:$0xff]
    %v102 = vld [vmem:[#allocation5 + $0x78] sm:$0xff]
    %v103 = vld [vmem:[#allocation5 + $0x80] sm:$0xff]
    %v104 = vld [vmem:[#allocation5 + $0x88] sm:$0xff]
    %v105 = vld [vmem:[#allocation5 + $0x90] sm:$0xff]
    %v106 = vld [vmem:[#allocation5 + $0x98] sm:$0xff]
    %v107 = vld [vmem:[#allocation5 + $0xa0] sm:$0xff]
    %v108 = vld [vmem:[#allocation5 + $0xa8] sm:$0xff]
    %v109 = vld [vmem:[#allocation5 + $0xb0] sm:$0xff]
    %v110 = vld [vmem:[#allocation5 + $0xb8] sm:$0xff]
    %v111 = vld [vmem:[#allocation5 + $0xc0] sm:$0xff]
    %v112 = vld [vmem:[#allocation5 + $0xc8] sm:$0xff]
    %v113 = vld [vmem:[#allocation5 + $0xd0] sm:$0xff]
    %v114 = vld [vmem:[#allocation5 + $0xd8] sm:$0xff]
    %v115 = vld [vmem:[#allocation5 + $0xe0] sm:$0xff]
    %v116 = vld [vmem:[#allocation5 + $0xe8] sm:$0xff]
    %v117 = vld [vmem:[#allocation5 + $0xf0] sm:$0xff]
    %v118 = vld [vmem:[#allocation5 + $0xf8] sm:$0xff]
    %v119 = vld [vmem:[#allocation5 + $0x100] sm:$0xff]
    %v120 = vld [vmem:[#allocation5 + $0x108] sm:$0xff]
    %v121 = vld [vmem:[#allocation5 + $0x110] sm:$0xff]
    %v122 = vld [vmem:[#allocation5 + $0x118] sm:$0xff]
    %v123 = vld [vmem:[#allocation5 + $0x120] sm:$0xff]
    %v124 = vld [vmem:[#allocation5 + $0x128] sm:$0xff]
    %v125 = vld [vmem:[#allocation5 + $0x130] sm:$0xff]
    %v126 = vld [vmem:[#allocation5 + $0x138] sm:$0xff]
    %v127 = vld [vmem:[#allocation5 + $0x140] sm:$0xff]
    %v128 = vld [vmem:[#allocation5 + $0x148] sm:$0xff]
    %v129 = vld [vmem:[#allocation5 + $0x150] sm:$0xff]
    %v130 = vld [vmem:[#allocation5 + $0x158] sm:$0xff]
    %v131 = vld [vmem:[#allocation5 + $0x160] sm:$0xff]
    %v132 = vld [vmem:[#allocation5 + $0x168] sm:$0xff]
    %v133 = vld [vmem:[#allocation5 + $0x170] sm:$0xff]
    %v134 = vld [vmem:[#allocation5 + $0x178] sm:$0xff]
    %v135 = vld [vmem:[#allocation5 + $0x180] sm:$0xff]
    %v136 = vld [vmem:[#allocation5 + $0x188] sm:$0xff]
    %v137 = vld [vmem:[#allocation5 + $0x190] sm:$0xff]
    %v138 = vld [vmem:[#allocation5 + $0x198] sm:$0xff]
    %v139 = vld [vmem:[#allocation5 + $0x1a0] sm:$0xff]
    %v140 = vld [vmem:[#allocation5 + $0x1a8] sm:$0xff]
    %v141 = vld [vmem:[#allocation5 + $0x1b0] sm:$0xff]
    %v142 = vld [vmem:[#allocation5 + $0x1b8] sm:$0xff]
    %v143 = vld [vmem:[#allocation5 + $0x1c0] sm:$0xff]
    %v144 = vld [vmem:[#allocation5 + $0x1c8] sm:$0xff]
    %v145 = vld [vmem:[#allocation5 + $0x1d0] sm:$0xff]
    %v146 = vld [vmem:[#allocation5 + $0x1d8] sm:$0xff]
    %v147 = vld [vmem:[#allocation5 + $0x1e0] sm:$0xff]
    %v148 = vld [vmem:[#allocation5 + $0x1e8] sm:$0xff]
    %v149 = vld [vmem:[#allocation5 + $0x1f0] sm:$0xff]
    %v150 = vld [vmem:[#allocation5 + $0x1f8] sm:$0xff]
    %v151 = vld [vmem:[#allocation7] sm:$0xf]
    %v153 = vperm.slane %v151, 0
    %v154 = vperm.slane %v151, 1
    %v155 = vperm.slane %v151, 2
    %v156 = vperm.slane %v151, 3
    %161 = vmatpush.msra.mxu0 %v147
    %162 = vmatpush.msra.mxu0 %v143
    %163 = vmatpush.msra.mxu0 %v139
    %164 = vmatpush.msra.mxu0 %v135
    %165 = vmatpush.msra.mxu0 %v131
    %166 = vmatpush.msra.mxu0 %v127
    %167 = vmatpush.msra.mxu0 %v123
    %168 = vmatpush.msra.mxu0 %v119
    %169 = vmatpush.msra.mxu0 %v115
    %170 = vmatpush.msra.mxu0 %v111
    %171 = vmatpush.msra.mxu0 %v107
    %172 = vmatpush.msra.mxu0 %v103
    %173 = vmatpush.msra.mxu0 %v99
    %174 = vmatpush.msra.mxu0 %v95
    %175 = vmatpush.msra.mxu0 %v91
    %176 = vmatpush.msra.mxu0 %v87
    %177 = vmatmul.f32.gmra.mxu0 %v82
    %v178 = vpop.f32.mrf.mxu0
    %v179 = vadd.f32 %v153, %v178
    %180 = vmatmul.f32.gmra.mxu0 %v83
    %v181 = vpop.f32.mrf.mxu0
    %v182 = vadd.f32 %v153, %v181
    %183 = vmatmul.f32.gmra.mxu0 %v84
    %v184 = vpop.f32.mrf.mxu0
    %v185 = vadd.f32 %v153, %v184
    %186 = vmatmul.f32.gmra.mxu0 %v85
    %v187 = vpop.f32.mrf.mxu0
    %v188 = vadd.f32 %v153, %v187
    %189 = vmatmul.f32.gmra.mxu0 %v86
    %v190 = vpop.f32.mrf.mxu0
    %v191 = vadd.f32 %v153, %v190
    %192 = vdwg.mxu0
    %193 = vmatpush.msra.mxu0 %v148
    %194 = vmatpush.msra.mxu0 %v144
    %195 = vmatpush.msra.mxu0 %v140
    %196 = vmatpush.msra.mxu0 %v136
    %197 = vmatpush.msra.mxu0 %v132
    %198 = vmatpush.msra.mxu0 %v128
    %199 = vmatpush.msra.mxu0 %v124
    %200 = vmatpush.msra.mxu0 %v120
    %201 = vmatpush.msra.mxu0 %v116
    %202 = vmatpush.msra.mxu0 %v112
    %203 = vmatpush.msra.mxu0 %v108
    %204 = vmatpush.msra.mxu0 %v104
    %205 = vmatpush.msra.mxu0 %v100
    %206 = vmatpush.msra.mxu0 %v96
    %207 = vmatpush.msra.mxu0 %v92
    %208 = vmatpush.msra.mxu0 %v88
    %209 = vmatmul.f32.gmra.mxu0 %v82
    %v210 = vpop.f32.mrf.mxu0
    %v211 = vadd.f32 %v154, %v210
    %212 = vmatmul.f32.gmra.mxu0 %v83
    %v213 = vpop.f32.mrf.mxu0
    %v214 = vadd.f32 %v154, %v213
    %215 = vmatmul.f32.gmra.mxu0 %v84
    %v216 = vpop.f32.mrf.mxu0
    %v217 = vadd.f32 %v154, %v216
    %218 = vmatmul.f32.gmra.mxu0 %v85
    %v219 = vpop.f32.mrf.mxu0
    %v220 = vadd.f32 %v154, %v219
    %221 = vmatmul.f32.gmra.mxu0 %v86
    %v222 = vpop.f32.mrf.mxu0
    %v223 = vadd.f32 %v154, %v222
    %224 = vdwg.mxu0
    %225 = vmatpush.msra.mxu0 %v149
    %226 = vmatpush.msra.mxu0 %v145
    %227 = vmatpush.msra.mxu0 %v141
    %228 = vmatpush.msra.mxu0 %v137
    %229 = vmatpush.msra.mxu0 %v133
    %230 = vmatpush.msra.mxu0 %v129
    %231 = vmatpush.msra.mxu0 %v125
    %232 = vmatpush.msra.mxu0 %v121
    %233 = vmatpush.msra.mxu0 %v117
    %234 = vmatpush.msra.mxu0 %v113
    %235 = vmatpush.msra.mxu0 %v109
    %236 = vmatpush.msra.mxu0 %v105
    %237 = vmatpush.msra.mxu0 %v101
    %238 = vmatpush.msra.mxu0 %v97
    %239 = vmatpush.msra.mxu0 %v93
    %240 = vmatpush.msra.mxu0 %v89
    %241 = vmatmul.f32.gmra.mxu0 %v82
    %v242 = vpop.f32.mrf.mxu0
    %v243 = vadd.f32 %v155, %v242
    %244 = vmatmul.f32.gmra.mxu0 %v83
    %v245 = vpop.f32.mrf.mxu0
    %v246 = vadd.f32 %v155, %v245
    %247 = vmatmul.f32.gmra.mxu0 %v84
    %v248 = vpop.f32.mrf.mxu0
    %v249 = vadd.f32 %v155, %v248
    %250 = vmatmul.f32.gmra.mxu0 %v85
    %v251 = vpop.f32.mrf.mxu0
    %v252 = vadd.f32 %v155, %v251
    %253 = vmatmul.f32.gmra.mxu0 %v86
    %v254 = vpop.f32.mrf.mxu0
    %v255 = vadd.f32 %v155, %v254
    %256 = vdwg.mxu0
    %257 = vmatpush.msra.mxu0 %v150
    %258 = vmatpush.msra.mxu0 %v146
    %259 = vmatpush.msra.mxu0 %v142
    %260 = vmatpush.msra.mxu0 %v138
    %261 = vmatpush.msra.mxu0 %v134
    %262 = vmatpush.msra.mxu0 %v130
    %263 = vmatpush.msra.mxu0 %v126
    %264 = vmatpush.msra.mxu0 %v122
    %265 = vmatpush.msra.mxu0 %v118
    %266 = vmatpush.msra.mxu0 %v114
    %267 = vmatpush.msra.mxu0 %v110
    %268 = vmatpush.msra.mxu0 %v106
    %269 = vmatpush.msra.mxu0 %v102
    %270 = vmatpush.msra.mxu0 %v98
    %271 = vmatpush.msra.mxu0 %v94
    %272 = vmatpush.msra.mxu0 %v90
    %273 = vmatmul.f32.gmra.mxu0 %v82
    %v274 = vpop.f32.mrf.mxu0
    %v275 = vadd.f32 %v156, %v274
    %276 = vmatmul.f32.gmra.mxu0 %v83
    %v277 = vpop.f32.mrf.mxu0
    %v278 = vadd.f32 %v156, %v277
    %279 = vmatmul.f32.gmra.mxu0 %v84
    %v280 = vpop.f32.mrf.mxu0
    %v281 = vadd.f32 %v156, %v280
    %282 = vmatmul.f32.gmra.mxu0 %v85
    %v283 = vpop.f32.mrf.mxu0
    %v284 = vadd.f32 %v156, %v283
    %285 = vmatmul.f32.gmra.mxu0 %v86
    %v286 = vpop.f32.mrf.mxu0
    %v287 = vadd.f32 %v156, %v286
    %288 = vdwg.mxu0
    %v289 = vmul.f32 %v179, 0.5
    %v290 = vmul.f32 %v211, 0.5
    %v291 = vmul.f32 %v243, 0.5
    %v292 = vmul.f32 %v275, 0.5
    %v293 = vmul.f32 %v182, 0.5
    %v294 = vmul.f32 %v214, 0.5
    %v295 = vmul.f32 %v246, 0.5
    %v296 = vmul.f32 %v278, 0.5
    %v297 = vmul.f32 %v185, 0.5
    %v298 = vmul.f32 %v217, 0.5
    %v299 = vmul.f32 %v249, 0.5
    %v300 = vmul.f32 %v281, 0.5
    %v301 = vmul.f32 %v188, 0.5
    %v302 = vmul.f32 %v220, 0.5
    %v303 = vmul.f32 %v252, 0.5
    %v304 = vmul.f32 %v284, 0.5
    %v305 = vmul.f32 %v191, 0.5
    %v306 = vmul.f32 %v223, 0.5
    %v307 = vmul.f32 %v255, 0.5
    %v308 = vmul.f32 %v287, 0.5
    %v309 = vmul.f32 %v179, 0.70710677
    %v310 = vmul.f32 %v211, 0.70710677
    %v311 = vmul.f32 %v243, 0.70710677
    %v312 = vmul.f32 %v275, 0.70710677
    %v313 = vmul.f32 %v182, 0.70710677
    %v314 = vmul.f32 %v214, 0.70710677
    %v315 = vmul.f32 %v246, 0.70710677
    %v316 = vmul.f32 %v278, 0.70710677
    %v317 = vmul.f32 %v185, 0.70710677
    %v318 = vmul.f32 %v217, 0.70710677
    %v319 = vmul.f32 %v249, 0.70710677
    %v320 = vmul.f32 %v281, 0.70710677
    %v321 = vmul.f32 %v188, 0.70710677
    %v322 = vmul.f32 %v220, 0.70710677
    %v323 = vmul.f32 %v252, 0.70710677
    %v324 = vmul.f32 %v284, 0.70710677
    %v325 = vmul.f32 %v191, 0.70710677
    %v326 = vmul.f32 %v223, 0.70710677
    %v327 = vmul.f32 %v255, 0.70710677
    %v328 = vmul.f32 %v287, 0.70710677
    %v329 = vmul.f32 %v309, %v309
    %v330 = vmin.f32 16.0, %v329
    %v331 = vmul.f32 %v330, 2.1237322e-06
    %v332 = vadd.f32 %v331, 0.00028619796
    %v333 = vmul.f32 %v330, %v332
    %v334 = vadd.f32 %v333, 0.0036580483
    %v335 = vmul.f32 %v330, %v334
    %v336 = vadd.f32 %v335, 0.05243302
    %v337 = vmul.f32 %v330, %v336
    %v338 = vadd.f32 %v337, 0.18741608
    %v339 = vmul.f32 %v330, %v338
    %v340 = vadd.f32 %v339, 1.1283791
    %v341 = vmul.f32 %v309, %v340
    %v342 = vmul.f32 %v330, 3.8918573e-05
    %v343 = vadd.f32 %v342, 0.001143296
    %v344 = vmul.f32 %v330, %v343
    %v345 = vadd.f32 %v344, 0.014752088
    %v346 = vmul.f32 %v330, %v345
    %v347 = vadd.f32 %v346, 0.112945676
    %v348 = vmul.f32 %v330, %v347
    %v349 = vadd.f32 %v348, 0.4994258
    %v350 = vmul.f32 %v330, %v349
    %v351 = vadd.f32 %v350, 1.0
    %v352 = vrcp.pop %v351
    %v353 = vmul.f32 %v351, %v352
    %v354 = vsub.f32 1.0, %v353
    %v355 = vmul.f32 %v352, %v354
    %v356 = vadd.f32 %v352, %v355
    %vm357 = vweird.f32 %v351
    %vm358 = vweird.f32 %v352
    %vm359 = vmor %vm357, %vm358
    %v360 = vsel %vm359, %v352, %v356
    %v361 = vand.u32 2147483647, %v351
    %vm362 = vcmp.eq.f32.partialorder %v361, 8.507059e+37
    %v363 = vand.u32 %v351, 2147483648
    %v364 = vor.u32 1.1754944e-38, %v363
    %v365 = vsel %vm362, %v364, %v360
    %v366 = vmul.f32 %v341, %v365
    %v367 = vmin.f32 %v366, 1.0
    %v368 = vmax.f32 %v367, -1.0
    %v369 = vmul.f32 %v310, %v310
    %v370 = vmin.f32 16.0, %v369
    %v371 = vmul.f32 %v370, 2.1237322e-06
    %v372 = vadd.f32 %v371, 0.00028619796
    %v373 = vmul.f32 %v370, %v372
    %v374 = vadd.f32 %v373, 0.0036580483
    %v375 = vmul.f32 %v370, %v374
    %v376 = vadd.f32 %v375, 0.05243302
    %v377 = vmul.f32 %v370, %v376
    %v378 = vadd.f32 %v377, 0.18741608
    %v379 = vmul.f32 %v370, %v378
    %v380 = vadd.f32 %v379, 1.1283791
    %v381 = vmul.f32 %v310, %v380
    %v382 = vmul.f32 %v370, 3.8918573e-05
    %v383 = vadd.f32 %v382, 0.001143296
    %v384 = vmul.f32 %v370, %v383
    %v385 = vadd.f32 %v384, 0.014752088
    %v386 = vmul.f32 %v370, %v385
    %v387 = vadd.f32 %v386, 0.112945676
    %v388 = vmul.f32 %v370, %v387
    %v389 = vadd.f32 %v388, 0.4994258
    %v390 = vmul.f32 %v370, %v389
    %v391 = vadd.f32 %v390, 1.0
    %v392 = vrcp.pop %v391
    %v393 = vmul.f32 %v391, %v392
    %v394 = vsub.f32 1.0, %v393
    %v395 = vmul.f32 %v392, %v394
    %v396 = vadd.f32 %v392, %v395
    %vm397 = vweird.f32 %v391
    %vm398 = vweird.f32 %v392
    %vm399 = vmor %vm397, %vm398
    %v400 = vsel %vm399, %v392, %v396
    %v401 = vand.u32 2147483647, %v391
    %vm402 = vcmp.eq.f32.partialorder %v401, 8.507059e+37
    %v403 = vand.u32 %v391, 2147483648
    %v404 = vor.u32 1.1754944e-38, %v403
    %v405 = vsel %vm402, %v404, %v400
    %v406 = vmul.f32 %v381, %v405
    %v407 = vmin.f32 %v406, 1.0
    %v408 = vmax.f32 %v407, -1.0
    %v409 = vmul.f32 %v311, %v311
    %v410 = vmin.f32 16.0, %v409
    %v411 = vmul.f32 %v410, 2.1237322e-06
    %v412 = vadd.f32 %v411, 0.00028619796
    %v413 = vmul.f32 %v410, %v412
    %v414 = vadd.f32 %v413, 0.0036580483
    %v415 = vmul.f32 %v410, %v414
    %v416 = vadd.f32 %v415, 0.05243302
    %v417 = vmul.f32 %v410, %v416
    %v418 = vadd.f32 %v417, 0.18741608
    %v419 = vmul.f32 %v410, %v418
    %v420 = vadd.f32 %v419, 1.1283791
    %v421 = vmul.f32 %v311, %v420
    %v422 = vmul.f32 %v410, 3.8918573e-05
    %v423 = vadd.f32 %v422, 0.001143296
    %v424 = vmul.f32 %v410, %v423
    %v425 = vadd.f32 %v424, 0.014752088
    %v426 = vmul.f32 %v410, %v425
    %v427 = vadd.f32 %v426, 0.112945676
    %v428 = vmul.f32 %v410, %v427
    %v429 = vadd.f32 %v428, 0.4994258
    %v430 = vmul.f32 %v410, %v429
    %v431 = vadd.f32 %v430, 1.0
    %v432 = vrcp.pop %v431
    %v433 = vmul.f32 %v431, %v432
    %v434 = vsub.f32 1.0, %v433
    %v435 = vmul.f32 %v432, %v434
    %v436 = vadd.f32 %v432, %v435
    %vm437 = vweird.f32 %v431
    %vm438 = vweird.f32 %v432
    %vm439 = vmor %vm437, %vm438
    %v440 = vsel %vm439, %v432, %v436
    %v441 = vand.u32 2147483647, %v431
    %vm442 = vcmp.eq.f32.partialorder %v441, 8.507059e+37
    %v443 = vand.u32 %v431, 2147483648
    %v444 = vor.u32 1.1754944e-38, %v443
    %v445 = vsel %vm442, %v444, %v440
    %v446 = vmul.f32 %v421, %v445
    %v447 = vmin.f32 %v446, 1.0
    %v448 = vmax.f32 %v447, -1.0
    %v449 = vmul.f32 %v312, %v312
    %v450 = vmin.f32 16.0, %v449
    %v451 = vmul.f32 %v450, 2.1237322e-06
    %v452 = vadd.f32 %v451, 0.00028619796
    %v453 = vmul.f32 %v450, %v452
    %v454 = vadd.f32 %v453, 0.0036580483
    %v455 = vmul.f32 %v450, %v454
    %v456 = vadd.f32 %v455, 0.05243302
    %v457 = vmul.f32 %v450, %v456
    %v458 = vadd.f32 %v457, 0.18741608
    %v459 = vmul.f32 %v450, %v458
    %v460 = vadd.f32 %v459, 1.1283791
    %v461 = vmul.f32 %v312, %v460
    %v462 = vmul.f32 %v450, 3.8918573e-05
    %v463 = vadd.f32 %v462, 0.001143296
    %v464 = vmul.f32 %v450, %v463
    %v465 = vadd.f32 %v464, 0.014752088
    %v466 = vmul.f32 %v450, %v465
    %v467 = vadd.f32 %v466, 0.112945676
    %v468 = vmul.f32 %v450, %v467
    %v469 = vadd.f32 %v468, 0.4994258
    %v470 = vmul.f32 %v450, %v469
    %v471 = vadd.f32 %v470, 1.0
    %v472 = vrcp.pop %v471
    %v473 = vmul.f32 %v471, %v472
    %v474 = vsub.f32 1.0, %v473
    %v475 = vmul.f32 %v472, %v474
    %v476 = vadd.f32 %v472, %v475
    %vm477 = vweird.f32 %v471
    %vm478 = vweird.f32 %v472
    %vm479 = vmor %vm477, %vm478
    %v480 = vsel %vm479, %v472, %v476
    %v481 = vand.u32 2147483647, %v471
    %vm482 = vcmp.eq.f32.partialorder %v481, 8.507059e+37
    %v483 = vand.u32 %v471, 2147483648
    %v484 = vor.u32 1.1754944e-38, %v483
    %v485 = vsel %vm482, %v484, %v480
    %v486 = vmul.f32 %v461, %v485
    %v487 = vmin.f32 %v486, 1.0
    %v488 = vmax.f32 %v487, -1.0
    %v489 = vmul.f32 %v313, %v313
    %v490 = vmin.f32 16.0, %v489
    %v491 = vmul.f32 %v490, 2.1237322e-06
    %v492 = vadd.f32 %v491, 0.00028619796
    %v493 = vmul.f32 %v490, %v492
    %v494 = vadd.f32 %v493, 0.0036580483
    %v495 = vmul.f32 %v490, %v494
    %v496 = vadd.f32 %v495, 0.05243302
    %v497 = vmul.f32 %v490, %v496
    %v498 = vadd.f32 %v497, 0.18741608
    %v499 = vmul.f32 %v490, %v498
    %v500 = vadd.f32 %v499, 1.1283791
    %v501 = vmul.f32 %v313, %v500
    %v502 = vmul.f32 %v490, 3.8918573e-05
    %v503 = vadd.f32 %v502, 0.001143296
    %v504 = vmul.f32 %v490, %v503
    %v505 = vadd.f32 %v504, 0.014752088
    %v506 = vmul.f32 %v490, %v505
    %v507 = vadd.f32 %v506, 0.112945676
    %v508 = vmul.f32 %v490, %v507
    %v509 = vadd.f32 %v508, 0.4994258
    %v510 = vmul.f32 %v490, %v509
    %v511 = vadd.f32 %v510, 1.0
    %v512 = vrcp.pop %v511
    %v513 = vmul.f32 %v511, %v512
    %v514 = vsub.f32 1.0, %v513
    %v515 = vmul.f32 %v512, %v514
    %v516 = vadd.f32 %v512, %v515
    %vm517 = vweird.f32 %v511
    %vm518 = vweird.f32 %v512
    %vm519 = vmor %vm517, %vm518
    %v520 = vsel %vm519, %v512, %v516
    %v521 = vand.u32 2147483647, %v511
    %vm522 = vcmp.eq.f32.partialorder %v521, 8.507059e+37
    %v523 = vand.u32 %v511, 2147483648
    %v524 = vor.u32 1.1754944e-38, %v523
    %v525 = vsel %vm522, %v524, %v520
    %v526 = vmul.f32 %v501, %v525
    %v527 = vmin.f32 %v526, 1.0
    %v528 = vmax.f32 %v527, -1.0
    %v529 = vmul.f32 %v314, %v314
    %v530 = vmin.f32 16.0, %v529
    %v531 = vmul.f32 %v530, 2.1237322e-06
    %v532 = vadd.f32 %v531, 0.00028619796
    %v533 = vmul.f32 %v530, %v532
    %v534 = vadd.f32 %v533, 0.0036580483
    %v535 = vmul.f32 %v530, %v534
    %v536 = vadd.f32 %v535, 0.05243302
    %v537 = vmul.f32 %v530, %v536
    %v538 = vadd.f32 %v537, 0.18741608
    %v539 = vmul.f32 %v530, %v538
    %v540 = vadd.f32 %v539, 1.1283791
    %v541 = vmul.f32 %v314, %v540
    %v542 = vmul.f32 %v530, 3.8918573e-05
    %v543 = vadd.f32 %v542, 0.001143296
    %v544 = vmul.f32 %v530, %v543
    %v545 = vadd.f32 %v544, 0.014752088
    %v546 = vmul.f32 %v530, %v545
    %v547 = vadd.f32 %v546, 0.112945676
    %v548 = vmul.f32 %v530, %v547
    %v549 = vadd.f32 %v548, 0.4994258
    %v550 = vmul.f32 %v530, %v549
    %v551 = vadd.f32 %v550, 1.0
    %v552 = vrcp.pop %v551
    %v553 = vmul.f32 %v551, %v552
    %v554 = vsub.f32 1.0, %v553
    %v555 = vmul.f32 %v552, %v554
    %v556 = vadd.f32 %v552, %v555
    %vm557 = vweird.f32 %v551
    %vm558 = vweird.f32 %v552
    %vm559 = vmor %vm557, %vm558
    %v560 = vsel %vm559, %v552, %v556
    %v561 = vand.u32 2147483647, %v551
    %vm562 = vcmp.eq.f32.partialorder %v561, 8.507059e+37
    %v563 = vand.u32 %v551, 2147483648
    %v564 = vor.u32 1.1754944e-38, %v563
    %v565 = vsel %vm562, %v564, %v560
    %v566 = vmul.f32 %v541, %v565
    %v567 = vmin.f32 %v566, 1.0
    %v568 = vmax.f32 %v567, -1.0
    %v569 = vmul.f32 %v315, %v315
    %v570 = vmin.f32 16.0, %v569
    %v571 = vmul.f32 %v570, 2.1237322e-06
    %v572 = vadd.f32 %v571, 0.00028619796
    %v573 = vmul.f32 %v570, %v572
    %v574 = vadd.f32 %v573, 0.0036580483
    %v575 = vmul.f32 %v570, %v574
    %v576 = vadd.f32 %v575, 0.05243302
    %v577 = vmul.f32 %v570, %v576
    %v578 = vadd.f32 %v577, 0.18741608
    %v579 = vmul.f32 %v570, %v578
    %v580 = vadd.f32 %v579, 1.1283791
    %v581 = vmul.f32 %v315, %v580
    %v582 = vmul.f32 %v570, 3.8918573e-05
    %v583 = vadd.f32 %v582, 0.001143296
    %v584 = vmul.f32 %v570, %v583
    %v585 = vadd.f32 %v584, 0.014752088
    %v586 = vmul.f32 %v570, %v585
    %v587 = vadd.f32 %v586, 0.112945676
    %v588 = vmul.f32 %v570, %v587
    %v589 = vadd.f32 %v588, 0.4994258
    %v590 = vmul.f32 %v570, %v589
    %v591 = vadd.f32 %v590, 1.0
    %v592 = vrcp.pop %v591
    %v593 = vmul.f32 %v591, %v592
    %v594 = vsub.f32 1.0, %v593
    %v595 = vmul.f32 %v592, %v594
    %v596 = vadd.f32 %v592, %v595
    %vm597 = vweird.f32 %v591
    %vm598 = vweird.f32 %v592
    %vm599 = vmor %vm597, %vm598
    %v600 = vsel %vm599, %v592, %v596
    %v601 = vand.u32 2147483647, %v591
    %vm602 = vcmp.eq.f32.partialorder %v601, 8.507059e+37
    %v603 = vand.u32 %v591, 2147483648
    %v604 = vor.u32 1.1754944e-38, %v603
    %v605 = vsel %vm602, %v604, %v600
    %v606 = vmul.f32 %v581, %v605
    %v607 = vmin.f32 %v606, 1.0
    %v608 = vmax.f32 %v607, -1.0
    %v609 = vmul.f32 %v316, %v316
    %v610 = vmin.f32 16.0, %v609
    %v611 = vmul.f32 %v610, 2.1237322e-06
    %v612 = vadd.f32 %v611, 0.00028619796
    %v613 = vmul.f32 %v610, %v612
    %v614 = vadd.f32 %v613, 0.0036580483
    %v615 = vmul.f32 %v610, %v614
    %v616 = vadd.f32 %v615, 0.05243302
    %v617 = vmul.f32 %v610, %v616
    %v618 = vadd.f32 %v617, 0.18741608
    %v619 = vmul.f32 %v610, %v618
    %v620 = vadd.f32 %v619, 1.1283791
    %v621 = vmul.f32 %v316, %v620
    %v622 = vmul.f32 %v610, 3.8918573e-05
    %v623 = vadd.f32 %v622, 0.001143296
    %v624 = vmul.f32 %v610, %v623
    %v625 = vadd.f32 %v624, 0.014752088
    %v626 = vmul.f32 %v610, %v625
    %v627 = vadd.f32 %v626, 0.112945676
    %v628 = vmul.f32 %v610, %v627
    %v629 = vadd.f32 %v628, 0.4994258
    %v630 = vmul.f32 %v610, %v629
    %v631 = vadd.f32 %v630, 1.0
    %v632 = vrcp.pop %v631
    %v633 = vmul.f32 %v631, %v632
    %v634 = vsub.f32 1.0, %v633
    %v635 = vmul.f32 %v632, %v634
    %v636 = vadd.f32 %v632, %v635
    %vm637 = vweird.f32 %v631
    %vm638 = vweird.f32 %v632
    %vm639 = vmor %vm637, %vm638
    %v640 = vsel %vm639, %v632, %v636
    %v641 = vand.u32 2147483647, %v631
    %vm642 = vcmp.eq.f32.partialorder %v641, 8.507059e+37
    %v643 = vand.u32 %v631, 2147483648
    %v644 = vor.u32 1.1754944e-38, %v643
    %v645 = vsel %vm642, %v644, %v640
    %v646 = vmul.f32 %v621, %v645
    %v647 = vmin.f32 %v646, 1.0
    %v648 = vmax.f32 %v647, -1.0
    %v649 = vmul.f32 %v317, %v317
    %v650 = vmin.f32 16.0, %v649
    %v651 = vmul.f32 %v650, 2.1237322e-06
    %v652 = vadd.f32 %v651, 0.00028619796
    %v653 = vmul.f32 %v650, %v652
    %v654 = vadd.f32 %v653, 0.0036580483
    %v655 = vmul.f32 %v650, %v654
    %v656 = vadd.f32 %v655, 0.05243302
    %v657 = vmul.f32 %v650, %v656
    %v658 = vadd.f32 %v657, 0.18741608
    %v659 = vmul.f32 %v650, %v658
    %v660 = vadd.f32 %v659, 1.1283791
    %v661 = vmul.f32 %v317, %v660
    %v662 = vmul.f32 %v650, 3.8918573e-05
    %v663 = vadd.f32 %v662, 0.001143296
    %v664 = vmul.f32 %v650, %v663
    %v665 = vadd.f32 %v664, 0.014752088
    %v666 = vmul.f32 %v650, %v665
    %v667 = vadd.f32 %v666, 0.112945676
    %v668 = vmul.f32 %v650, %v667
    %v669 = vadd.f32 %v668, 0.4994258
    %v670 = vmul.f32 %v650, %v669
    %v671 = vadd.f32 %v670, 1.0
    %v672 = vrcp.pop %v671
    %v673 = vmul.f32 %v671, %v672
    %v674 = vsub.f32 1.0, %v673
    %v675 = vmul.f32 %v672, %v674
    %v676 = vadd.f32 %v672, %v675
    %vm677 = vweird.f32 %v671
    %vm678 = vweird.f32 %v672
    %vm679 = vmor %vm677, %vm678
    %v680 = vsel %vm679, %v672, %v676
    %v681 = vand.u32 2147483647, %v671
    %vm682 = vcmp.eq.f32.partialorder %v681, 8.507059e+37
    %v683 = vand.u32 %v671, 2147483648
    %v684 = vor.u32 1.1754944e-38, %v683
    %v685 = vsel %vm682, %v684, %v680
    %v686 = vmul.f32 %v661, %v685
    %v687 = vmin.f32 %v686, 1.0
    %v688 = vmax.f32 %v687, -1.0
    %v689 = vmul.f32 %v318, %v318
    %v690 = vmin.f32 16.0, %v689
    %v691 = vmul.f32 %v690, 2.1237322e-06
    %v692 = vadd.f32 %v691, 0.00028619796
    %v693 = vmul.f32 %v690, %v692
    %v694 = vadd.f32 %v693, 0.0036580483
    %v695 = vmul.f32 %v690, %v694
    %v696 = vadd.f32 %v695, 0.05243302
    %v697 = vmul.f32 %v690, %v696
    %v698 = vadd.f32 %v697, 0.18741608
    %v699 = vmul.f32 %v690, %v698
    %v700 = vadd.f32 %v699, 1.1283791
    %v701 = vmul.f32 %v318, %v700
    %v702 = vmul.f32 %v690, 3.8918573e-05
    %v703 = vadd.f32 %v702, 0.001143296
    %v704 = vmul.f32 %v690, %v703
    %v705 = vadd.f32 %v704, 0.014752088
    %v706 = vmul.f32 %v690, %v705
    %v707 = vadd.f32 %v706, 0.112945676
    %v708 = vmul.f32 %v690, %v707
    %v709 = vadd.f32 %v708, 0.4994258
    %v710 = vmul.f32 %v690, %v709
    %v711 = vadd.f32 %v710, 1.0
    %v712 = vrcp.pop %v711
    %v713 = vmul.f32 %v711, %v712
    %v714 = vsub.f32 1.0, %v713
    %v715 = vmul.f32 %v712, %v714
    %v716 = vadd.f32 %v712, %v715
    %vm717 = vweird.f32 %v711
    %vm718 = vweird.f32 %v712
    %vm719 = vmor %vm717, %vm718
    %v720 = vsel %vm719, %v712, %v716
    %v721 = vand.u32 2147483647, %v711
    %vm722 = vcmp.eq.f32.partialorder %v721, 8.507059e+37
    %v723 = vand.u32 %v711, 2147483648
    %v724 = vor.u32 1.1754944e-38, %v723
    %v725 = vsel %vm722, %v724, %v720
    %v726 = vmul.f32 %v701, %v725
    %v727 = vmin.f32 %v726, 1.0
    %v728 = vmax.f32 %v727, -1.0
    %v729 = vmul.f32 %v319, %v319
    %v730 = vmin.f32 16.0, %v729
    %v731 = vmul.f32 %v730, 2.1237322e-06
    %v732 = vadd.f32 %v731, 0.00028619796
    %v733 = vmul.f32 %v730, %v732
    %v734 = vadd.f32 %v733, 0.0036580483
    %v735 = vmul.f32 %v730, %v734
    %v736 = vadd.f32 %v735, 0.05243302
    %v737 = vmul.f32 %v730, %v736
    %v738 = vadd.f32 %v737, 0.18741608
    %v739 = vmul.f32 %v730, %v738
    %v740 = vadd.f32 %v739, 1.1283791
    %v741 = vmul.f32 %v319, %v740
    %v742 = vmul.f32 %v730, 3.8918573e-05
    %v743 = vadd.f32 %v742, 0.001143296
    %v744 = vmul.f32 %v730, %v743
    %v745 = vadd.f32 %v744, 0.014752088
    %v746 = vmul.f32 %v730, %v745
    %v747 = vadd.f32 %v746, 0.112945676
    %v748 = vmul.f32 %v730, %v747
    %v749 = vadd.f32 %v748, 0.4994258
    %v750 = vmul.f32 %v730, %v749
    %v751 = vadd.f32 %v750, 1.0
    %v752 = vrcp.pop %v751
    %v753 = vmul.f32 %v751, %v752
    %v754 = vsub.f32 1.0, %v753
    %v755 = vmul.f32 %v752, %v754
    %v756 = vadd.f32 %v752, %v755
    %vm757 = vweird.f32 %v751
    %vm758 = vweird.f32 %v752
    %vm759 = vmor %vm757, %vm758
    %v760 = vsel %vm759, %v752, %v756
    %v761 = vand.u32 2147483647, %v751
    %vm762 = vcmp.eq.f32.partialorder %v761, 8.507059e+37
    %v763 = vand.u32 %v751, 2147483648
    %v764 = vor.u32 1.1754944e-38, %v763
    %v765 = vsel %vm762, %v764, %v760
    %v766 = vmul.f32 %v741, %v765
    %v767 = vmin.f32 %v766, 1.0
    %v768 = vmax.f32 %v767, -1.0
    %v769 = vmul.f32 %v320, %v320
    %v770 = vmin.f32 16.0, %v769
    %v771 = vmul.f32 %v770, 2.1237322e-06
    %v772 = vadd.f32 %v771, 0.00028619796
    %v773 = vmul.f32 %v770, %v772
    %v774 = vadd.f32 %v773, 0.0036580483
    %v775 = vmul.f32 %v770, %v774
    %v776 = vadd.f32 %v775, 0.05243302
    %v777 = vmul.f32 %v770, %v776
    %v778 = vadd.f32 %v777, 0.18741608
    %v779 = vmul.f32 %v770, %v778
    %v780 = vadd.f32 %v779, 1.1283791
    %v781 = vmul.f32 %v320, %v780
    %v782 = vmul.f32 %v770, 3.8918573e-05
    %v783 = vadd.f32 %v782, 0.001143296
    %v784 = vmul.f32 %v770, %v783
    %v785 = vadd.f32 %v784, 0.014752088
    %v786 = vmul.f32 %v770, %v785
    %v787 = vadd.f32 %v786, 0.112945676
    %v788 = vmul.f32 %v770, %v787
    %v789 = vadd.f32 %v788, 0.4994258
    %v790 = vmul.f32 %v770, %v789
    %v791 = vadd.f32 %v790, 1.0
    %v792 = vrcp.pop %v791
    %v793 = vmul.f32 %v791, %v792
    %v794 = vsub.f32 1.0, %v793
    %v795 = vmul.f32 %v792, %v794
    %v796 = vadd.f32 %v792, %v795
    %vm797 = vweird.f32 %v791
    %vm798 = vweird.f32 %v792
    %vm799 = vmor %vm797, %vm798
    %v800 = vsel %vm799, %v792, %v796
    %v801 = vand.u32 2147483647, %v791
    %vm802 = vcmp.eq.f32.partialorder %v801, 8.507059e+37
    %v803 = vand.u32 %v791, 2147483648
    %v804 = vor.u32 1.1754944e-38, %v803
    %v805 = vsel %vm802, %v804, %v800
    %v806 = vmul.f32 %v781, %v805
    %v807 = vmin.f32 %v806, 1.0
    %v808 = vmax.f32 %v807, -1.0
    %v809 = vmul.f32 %v321, %v321
    %v810 = vmin.f32 16.0, %v809
    %v811 = vmul.f32 %v810, 2.1237322e-06
    %v812 = vadd.f32 %v811, 0.00028619796
    %v813 = vmul.f32 %v810, %v812
    %v814 = vadd.f32 %v813, 0.0036580483
    %v815 = vmul.f32 %v810, %v814
    %v816 = vadd.f32 %v815, 0.05243302
    %v817 = vmul.f32 %v810, %v816
    %v818 = vadd.f32 %v817, 0.18741608
    %v819 = vmul.f32 %v810, %v818
    %v820 = vadd.f32 %v819, 1.1283791
    %v821 = vmul.f32 %v321, %v820
    %v822 = vmul.f32 %v810, 3.8918573e-05
    %v823 = vadd.f32 %v822, 0.001143296
    %v824 = vmul.f32 %v810, %v823
    %v825 = vadd.f32 %v824, 0.014752088
    %v826 = vmul.f32 %v810, %v825
    %v827 = vadd.f32 %v826, 0.112945676
    %v828 = vmul.f32 %v810, %v827
    %v829 = vadd.f32 %v828, 0.4994258
    %v830 = vmul.f32 %v810, %v829
    %v831 = vadd.f32 %v830, 1.0
    %v832 = vrcp.pop %v831
    %v833 = vmul.f32 %v831, %v832
    %v834 = vsub.f32 1.0, %v833
    %v835 = vmul.f32 %v832, %v834
    %v836 = vadd.f32 %v832, %v835
    %vm837 = vweird.f32 %v831
    %vm838 = vweird.f32 %v832
    %vm839 = vmor %vm837, %vm838
    %v840 = vsel %vm839, %v832, %v836
    %v841 = vand.u32 2147483647, %v831
    %vm842 = vcmp.eq.f32.partialorder %v841, 8.507059e+37
    %v843 = vand.u32 %v831, 2147483648
    %v844 = vor.u32 1.1754944e-38, %v843
    %v845 = vsel %vm842, %v844, %v840
    %v846 = vmul.f32 %v821, %v845
    %v847 = vmin.f32 %v846, 1.0
    %v848 = vmax.f32 %v847, -1.0
    %v849 = vmul.f32 %v322, %v322
    %v850 = vmin.f32 16.0, %v849
    %v851 = vmul.f32 %v850, 2.1237322e-06
    %v852 = vadd.f32 %v851, 0.00028619796
    %v853 = vmul.f32 %v850, %v852
    %v854 = vadd.f32 %v853, 0.0036580483
    %v855 = vmul.f32 %v850, %v854
    %v856 = vadd.f32 %v855, 0.05243302
    %v857 = vmul.f32 %v850, %v856
    %v858 = vadd.f32 %v857, 0.18741608
    %v859 = vmul.f32 %v850, %v858
    %v860 = vadd.f32 %v859, 1.1283791
    %v861 = vmul.f32 %v322, %v860
    %v862 = vmul.f32 %v850, 3.8918573e-05
    %v863 = vadd.f32 %v862, 0.001143296
    %v864 = vmul.f32 %v850, %v863
    %v865 = vadd.f32 %v864, 0.014752088
    %v866 = vmul.f32 %v850, %v865
    %v867 = vadd.f32 %v866, 0.112945676
    %v868 = vmul.f32 %v850, %v867
    %v869 = vadd.f32 %v868, 0.4994258
    %v870 = vmul.f32 %v850, %v869
    %v871 = vadd.f32 %v870, 1.0
    %v872 = vrcp.pop %v871
    %v873 = vmul.f32 %v871, %v872
    %v874 = vsub.f32 1.0, %v873
    %v875 = vmul.f32 %v872, %v874
    %v876 = vadd.f32 %v872, %v875
    %vm877 = vweird.f32 %v871
    %vm878 = vweird.f32 %v872
    %vm879 = vmor %vm877, %vm878
    %v880 = vsel %vm879, %v872, %v876
    %v881 = vand.u32 2147483647, %v871
    %vm882 = vcmp.eq.f32.partialorder %v881, 8.507059e+37
    %v883 = vand.u32 %v871, 2147483648
    %v884 = vor.u32 1.1754944e-38, %v883
    %v885 = vsel %vm882, %v884, %v880
    %v886 = vmul.f32 %v861, %v885
    %v887 = vmin.f32 %v886, 1.0
    %v888 = vmax.f32 %v887, -1.0
    %v889 = vmul.f32 %v323, %v323
    %v890 = vmin.f32 16.0, %v889
    %v891 = vmul.f32 %v890, 2.1237322e-06
    %v892 = vadd.f32 %v891, 0.00028619796
    %v893 = vmul.f32 %v890, %v892
    %v894 = vadd.f32 %v893, 0.0036580483
    %v895 = vmul.f32 %v890, %v894
    %v896 = vadd.f32 %v895, 0.05243302
    %v897 = vmul.f32 %v890, %v896
    %v898 = vadd.f32 %v897, 0.18741608
    %v899 = vmul.f32 %v890, %v898
    %v900 = vadd.f32 %v899, 1.1283791
    %v901 = vmul.f32 %v323, %v900
    %v902 = vmul.f32 %v890, 3.8918573e-05
    %v903 = vadd.f32 %v902, 0.001143296
    %v904 = vmul.f32 %v890, %v903
    %v905 = vadd.f32 %v904, 0.014752088
    %v906 = vmul.f32 %v890, %v905
    %v907 = vadd.f32 %v906, 0.112945676
    %v908 = vmul.f32 %v890, %v907
    %v909 = vadd.f32 %v908, 0.4994258
    %v910 = vmul.f32 %v890, %v909
    %v911 = vadd.f32 %v910, 1.0
    %v912 = vrcp.pop %v911
    %v913 = vmul.f32 %v911, %v912
    %v914 = vsub.f32 1.0, %v913
    %v915 = vmul.f32 %v912, %v914
    %v916 = vadd.f32 %v912, %v915
    %vm917 = vweird.f32 %v911
    %vm918 = vweird.f32 %v912
    %vm919 = vmor %vm917, %vm918
    %v920 = vsel %vm919, %v912, %v916
    %v921 = vand.u32 2147483647, %v911
    %vm922 = vcmp.eq.f32.partialorder %v921, 8.507059e+37
    %v923 = vand.u32 %v911, 2147483648
    %v924 = vor.u32 1.1754944e-38, %v923
    %v925 = vsel %vm922, %v924, %v920
    %v926 = vmul.f32 %v901, %v925
    %v927 = vmin.f32 %v926, 1.0
    %v928 = vmax.f32 %v927, -1.0
    %v929 = vmul.f32 %v324, %v324
    %v930 = vmin.f32 16.0, %v929
    %v931 = vmul.f32 %v930, 2.1237322e-06
    %v932 = vadd.f32 %v931, 0.00028619796
    %v933 = vmul.f32 %v930, %v932
    %v934 = vadd.f32 %v933, 0.0036580483
    %v935 = vmul.f32 %v930, %v934
    %v936 = vadd.f32 %v935, 0.05243302
    %v937 = vmul.f32 %v930, %v936
    %v938 = vadd.f32 %v937, 0.18741608
    %v939 = vmul.f32 %v930, %v938
    %v940 = vadd.f32 %v939, 1.1283791
    %v941 = vmul.f32 %v324, %v940
    %v942 = vmul.f32 %v930, 3.8918573e-05
    %v943 = vadd.f32 %v942, 0.001143296
    %v944 = vmul.f32 %v930, %v943
    %v945 = vadd.f32 %v944, 0.014752088
    %v946 = vmul.f32 %v930, %v945
    %v947 = vadd.f32 %v946, 0.112945676
    %v948 = vmul.f32 %v930, %v947
    %v949 = vadd.f32 %v948, 0.4994258
    %v950 = vmul.f32 %v930, %v949
    %v951 = vadd.f32 %v950, 1.0
    %v952 = vrcp.pop %v951
    %v953 = vmul.f32 %v951, %v952
    %v954 = vsub.f32 1.0, %v953
    %v955 = vmul.f32 %v952, %v954
    %v956 = vadd.f32 %v952, %v955
    %vm957 = vweird.f32 %v951
    %vm958 = vweird.f32 %v952
    %vm959 = vmor %vm957, %vm958
    %v960 = vsel %vm959, %v952, %v956
    %v961 = vand.u32 2147483647, %v951
    %vm962 = vcmp.eq.f32.partialorder %v961, 8.507059e+37
    %v963 = vand.u32 %v951, 2147483648
    %v964 = vor.u32 1.1754944e-38, %v963
    %v965 = vsel %vm962, %v964, %v960
    %v966 = vmul.f32 %v941, %v965
    %v967 = vmin.f32 %v966, 1.0
    %v968 = vmax.f32 %v967, -1.0
    %v969 = vmul.f32 %v325, %v325
    %v970 = vmin.f32 16.0, %v969
    %v971 = vmul.f32 %v970, 2.1237322e-06
    %v972 = vadd.f32 %v971, 0.00028619796
    %v973 = vmul.f32 %v970, %v972
    %v974 = vadd.f32 %v973, 0.0036580483
    %v975 = vmul.f32 %v970, %v974
    %v976 = vadd.f32 %v975, 0.05243302
    %v977 = vmul.f32 %v970, %v976
    %v978 = vadd.f32 %v977, 0.18741608
    %v979 = vmul.f32 %v970, %v978
    %v980 = vadd.f32 %v979, 1.1283791
    %v981 = vmul.f32 %v325, %v980
    %v982 = vmul.f32 %v970, 3.8918573e-05
    %v983 = vadd.f32 %v982, 0.001143296
    %v984 = vmul.f32 %v970, %v983
    %v985 = vadd.f32 %v984, 0.014752088
    %v986 = vmul.f32 %v970, %v985
    %v987 = vadd.f32 %v986, 0.112945676
    %v988 = vmul.f32 %v970, %v987
    %v989 = vadd.f32 %v988, 0.4994258
    %v990 = vmul.f32 %v970, %v989
    %v991 = vadd.f32 %v990, 1.0
    %v992 = vrcp.pop %v991
    %v993 = vmul.f32 %v991, %v992
    %v994 = vsub.f32 1.0, %v993
    %v995 = vmul.f32 %v992, %v994
    %v996 = vadd.f32 %v992, %v995
    %vm997 = vweird.f32 %v991
    %vm998 = vweird.f32 %v992
    %vm999 = vmor %vm997, %vm998
    %v1000 = vsel %vm999, %v992, %v996
    %v1001 = vand.u32 2147483647, %v991
    %vm1002 = vcmp.eq.f32.partialorder %v1001, 8.507059e+37
    %v1003 = vand.u32 %v991, 2147483648
    %v1004 = vor.u32 1.1754944e-38, %v1003
    %v1005 = vsel %vm1002, %v1004, %v1000
    %v1006 = vmul.f32 %v981, %v1005
    %v1007 = vmin.f32 %v1006, 1.0
    %v1008 = vmax.f32 %v1007, -1.0
    %v1009 = vmul.f32 %v326, %v326
    %v1010 = vmin.f32 16.0, %v1009
    %v1011 = vmul.f32 %v1010, 2.1237322e-06
    %v1012 = vadd.f32 %v1011, 0.00028619796
    %v1013 = vmul.f32 %v1010, %v1012
    %v1014 = vadd.f32 %v1013, 0.0036580483
    %v1015 = vmul.f32 %v1010, %v1014
    %v1016 = vadd.f32 %v1015, 0.05243302
    %v1017 = vmul.f32 %v1010, %v1016
    %v1018 = vadd.f32 %v1017, 0.18741608
    %v1019 = vmul.f32 %v1010, %v1018
    %v1020 = vadd.f32 %v1019, 1.1283791
    %v1021 = vmul.f32 %v326, %v1020
    %v1022 = vmul.f32 %v1010, 3.8918573e-05
    %v1023 = vadd.f32 %v1022, 0.001143296
    %v1024 = vmul.f32 %v1010, %v1023
    %v1025 = vadd.f32 %v1024, 0.014752088
    %v1026 = vmul.f32 %v1010, %v1025
    %v1027 = vadd.f32 %v1026, 0.112945676
    %v1028 = vmul.f32 %v1010, %v1027
    %v1029 = vadd.f32 %v1028, 0.4994258
    %v1030 = vmul.f32 %v1010, %v1029
    %v1031 = vadd.f32 %v1030, 1.0
    %v1032 = vrcp.pop %v1031
    %v1033 = vmul.f32 %v1031, %v1032
    %v1034 = vsub.f32 1.0, %v1033
    %v1035 = vmul.f32 %v1032, %v1034
    %v1036 = vadd.f32 %v1032, %v1035
    %vm1037 = vweird.f32 %v1031
    %vm1038 = vweird.f32 %v1032
    %vm1039 = vmor %vm1037, %vm1038
    %v1040 = vsel %vm1039, %v1032, %v1036
    %v1041 = vand.u32 2147483647, %v1031
    %vm1042 = vcmp.eq.f32.partialorder %v1041, 8.507059e+37
    %v1043 = vand.u32 %v1031, 2147483648
    %v1044 = vor.u32 1.1754944e-38, %v1043
    %v1045 = vsel %vm1042, %v1044, %v1040
    %v1046 = vmul.f32 %v1021, %v1045
    %v1047 = vmin.f32 %v1046, 1.0
    %v1048 = vmax.f32 %v1047, -1.0
    %v1049 = vmul.f32 %v327, %v327
    %v1050 = vmin.f32 16.0, %v1049
    %v1051 = vmul.f32 %v1050, 2.1237322e-06
    %v1052 = vadd.f32 %v1051, 0.00028619796
    %v1053 = vmul.f32 %v1050, %v1052
    %v1054 = vadd.f32 %v1053, 0.0036580483
    %v1055 = vmul.f32 %v1050, %v1054
    %v1056 = vadd.f32 %v1055, 0.05243302
    %v1057 = vmul.f32 %v1050, %v1056
    %v1058 = vadd.f32 %v1057, 0.18741608
    %v1059 = vmul.f32 %v1050, %v1058
    %v1060 = vadd.f32 %v1059, 1.1283791
    %v1061 = vmul.f32 %v327, %v1060
    %v1062 = vmul.f32 %v1050, 3.8918573e-05
    %v1063 = vadd.f32 %v1062, 0.001143296
    %v1064 = vmul.f32 %v1050, %v1063
    %v1065 = vadd.f32 %v1064, 0.014752088
    %v1066 = vmul.f32 %v1050, %v1065
    %v1067 = vadd.f32 %v1066, 0.112945676
    %v1068 = vmul.f32 %v1050, %v1067
    %v1069 = vadd.f32 %v1068, 0.4994258
    %v1070 = vmul.f32 %v1050, %v1069
    %v1071 = vadd.f32 %v1070, 1.0
    %v1072 = vrcp.pop %v1071
    %v1073 = vmul.f32 %v1071, %v1072
    %v1074 = vsub.f32 1.0, %v1073
    %v1075 = vmul.f32 %v1072, %v1074
    %v1076 = vadd.f32 %v1072, %v1075
    %vm1077 = vweird.f32 %v1071
    %vm1078 = vweird.f32 %v1072
    %vm1079 = vmor %vm1077, %vm1078
    %v1080 = vsel %vm1079, %v1072, %v1076
    %v1081 = vand.u32 2147483647, %v1071
    %vm1082 = vcmp.eq.f32.partialorder %v1081, 8.507059e+37
    %v1083 = vand.u32 %v1071, 2147483648
    %v1084 = vor.u32 1.1754944e-38, %v1083
    %v1085 = vsel %vm1082, %v1084, %v1080
    %v1086 = vmul.f32 %v1061, %v1085
    %v1087 = vmin.f32 %v1086, 1.0
    %v1088 = vmax.f32 %v1087, -1.0
    %v1089 = vmul.f32 %v328, %v328
    %v1090 = vmin.f32 16.0, %v1089
    %v1091 = vmul.f32 %v1090, 2.1237322e-06
    %v1092 = vadd.f32 %v1091, 0.00028619796
    %v1093 = vmul.f32 %v1090, %v1092
    %v1094 = vadd.f32 %v1093, 0.0036580483
    %v1095 = vmul.f32 %v1090, %v1094
    %v1096 = vadd.f32 %v1095, 0.05243302
    %v1097 = vmul.f32 %v1090, %v1096
    %v1098 = vadd.f32 %v1097, 0.18741608
    %v1099 = vmul.f32 %v1090, %v1098
    %v1100 = vadd.f32 %v1099, 1.1283791
    %v1101 = vmul.f32 %v328, %v1100
    %v1102 = vmul.f32 %v1090, 3.8918573e-05
    %v1103 = vadd.f32 %v1102, 0.001143296
    %v1104 = vmul.f32 %v1090, %v1103
    %v1105 = vadd.f32 %v1104, 0.014752088
    %v1106 = vmul.f32 %v1090, %v1105
    %v1107 = vadd.f32 %v1106, 0.112945676
    %v1108 = vmul.f32 %v1090, %v1107
    %v1109 = vadd.f32 %v1108, 0.4994258
    %v1110 = vmul.f32 %v1090, %v1109
    %v1111 = vadd.f32 %v1110, 1.0
    %v1112 = vrcp.pop %v1111
    %v1113 = vmul.f32 %v1111, %v1112
    %v1114 = vsub.f32 1.0, %v1113
    %v1115 = vmul.f32 %v1112, %v1114
    %v1116 = vadd.f32 %v1112, %v1115
    %vm1117 = vweird.f32 %v1111
    %vm1118 = vweird.f32 %v1112
    %vm1119 = vmor %vm1117, %vm1118
    %v1120 = vsel %vm1119, %v1112, %v1116
    %v1121 = vand.u32 2147483647, %v1111
    %vm1122 = vcmp.eq.f32.partialorder %v1121, 8.507059e+37
    %v1123 = vand.u32 %v1111, 2147483648
    %v1124 = vor.u32 1.1754944e-38, %v1123
    %v1125 = vsel %vm1122, %v1124, %v1120
    %v1126 = vmul.f32 %v1101, %v1125
    %v1127 = vmin.f32 %v1126, 1.0
    %v1128 = vmax.f32 %v1127, -1.0
    %v1129 = vadd.f32 %v368, 1.0
    %v1130 = vadd.f32 %v408, 1.0
    %v1131 = vadd.f32 %v448, 1.0
    %v1132 = vadd.f32 %v488, 1.0
    %v1133 = vadd.f32 %v528, 1.0
    %v1134 = vadd.f32 %v568, 1.0
    %v1135 = vadd.f32 %v608, 1.0
    %v1136 = vadd.f32 %v648, 1.0
    %v1137 = vadd.f32 %v688, 1.0
    %v1138 = vadd.f32 %v728, 1.0
    %v1139 = vadd.f32 %v768, 1.0
    %v1140 = vadd.f32 %v808, 1.0
    %v1141 = vadd.f32 %v848, 1.0
    %v1142 = vadd.f32 %v888, 1.0
    %v1143 = vadd.f32 %v928, 1.0
    %v1144 = vadd.f32 %v968, 1.0
    %v1145 = vadd.f32 %v1008, 1.0
    %v1146 = vadd.f32 %v1048, 1.0
    %v1147 = vadd.f32 %v1088, 1.0
    %v1148 = vadd.f32 %v1128, 1.0
    %v1149 = vmul.f32 %v289, %v1129
    %v1150 = vmul.f32 %v290, %v1130
    %v1151 = vmul.f32 %v291, %v1131
    %v1152 = vmul.f32 %v292, %v1132
    %v1153 = vmul.f32 %v293, %v1133
    %v1154 = vmul.f32 %v294, %v1134
    %v1155 = vmul.f32 %v295, %v1135
    %v1156 = vmul.f32 %v296, %v1136
    %v1157 = vmul.f32 %v297, %v1137
    %v1158 = vmul.f32 %v298, %v1138
    %v1159 = vmul.f32 %v299, %v1139
    %v1160 = vmul.f32 %v300, %v1140
    %v1161 = vmul.f32 %v301, %v1141
    %v1162 = vmul.f32 %v302, %v1142
    %v1163 = vmul.f32 %v303, %v1143
    %v1164 = vmul.f32 %v304, %v1144
    %v1165 = vmul.f32 %v305, %v1145
    %v1166 = vmul.f32 %v306, %v1146
    %v1167 = vmul.f32 %v307, %v1147
    %v1168 = vmul.f32 %v308, %v1148
    %v1169 = vld [vmem:[#allocation8] sm:$0xff]
    %v1170 = vld [vmem:[#allocation8 + $0x8] sm:$0xff]
    %v1171 = vld [vmem:[#allocation8 + $0x10] sm:$0xff]
    %v1172 = vld [vmem:[#allocation8 + $0x18] sm:$0xff]
    %v1173 = vld [vmem:[#allocation8 + $0x20] sm:$0xff]
    %v1174 = vld [vmem:[#allocation8 + $0x28] sm:$0xff]
    %v1175 = vld [vmem:[#allocation8 + $0x30] sm:$0xff]
    %v1176 = vld [vmem:[#allocation8 + $0x38] sm:$0xff]
    %v1177 = vld [vmem:[#allocation8 + $0x40] sm:$0xff]
    %v1178 = vld [vmem:[#allocation8 + $0x48] sm:$0xff]
    %v1179 = vld [vmem:[#allocation8 + $0x50] sm:$0xff]
    %v1180 = vld [vmem:[#allocation8 + $0x58] sm:$0xff]
    %v1181 = vld [vmem:[#allocation8 + $0x60] sm:$0xff]
    %v1182 = vld [vmem:[#allocation8 + $0x68] sm:$0xff]
    %v1183 = vld [vmem:[#allocation8 + $0x70] sm:$0xff]
    %v1184 = vld [vmem:[#allocation8 + $0x78] sm:$0xff]
    %v1185 = vld [vmem:[#allocation8 + $0x80] sm:$0xff]
    %v1186 = vld [vmem:[#allocation8 + $0x88] sm:$0xff]
    %v1187 = vld [vmem:[#allocation8 + $0x90] sm:$0xff]
    %v1188 = vld [vmem:[#allocation8 + $0x98] sm:$0xff]
    %v1189 = vld [vmem:[#allocation8 + $0xa0] sm:$0xff]
    %v1190 = vld [vmem:[#allocation8 + $0xa8] sm:$0xff]
    %v1191 = vld [vmem:[#allocation8 + $0xb0] sm:$0xff]
    %v1192 = vld [vmem:[#allocation8 + $0xb8] sm:$0xff]
    %v1193 = vld [vmem:[#allocation8 + $0xc0] sm:$0xff]
    %v1194 = vld [vmem:[#allocation8 + $0xc8] sm:$0xff]
    %v1195 = vld [vmem:[#allocation8 + $0xd0] sm:$0xff]
    %v1196 = vld [vmem:[#allocation8 + $0xd8] sm:$0xff]
    %v1197 = vld [vmem:[#allocation8 + $0xe0] sm:$0xff]
    %v1198 = vld [vmem:[#allocation8 + $0xe8] sm:$0xff]
    %v1199 = vld [vmem:[#allocation8 + $0xf0] sm:$0xff]
    %v1200 = vld [vmem:[#allocation8 + $0xf8] sm:$0xff]
    %v1201 = vld [vmem:[#allocation8 + $0x100] sm:$0xff]
    %v1202 = vld [vmem:[#allocation8 + $0x108] sm:$0xff]
    %v1203 = vld [vmem:[#allocation8 + $0x110] sm:$0xff]
    %v1204 = vld [vmem:[#allocation8 + $0x118] sm:$0xff]
    %v1205 = vld [vmem:[#allocation8 + $0x120] sm:$0xff]
    %v1206 = vld [vmem:[#allocation8 + $0x128] sm:$0xff]
    %v1207 = vld [vmem:[#allocation8 + $0x130] sm:$0xff]
    %v1208 = vld [vmem:[#allocation8 + $0x138] sm:$0xff]
    %v1209 = vld [vmem:[#allocation8 + $0x140] sm:$0xff]
    %v1210 = vld [vmem:[#allocation8 + $0x148] sm:$0xff]
    %v1211 = vld [vmem:[#allocation8 + $0x150] sm:$0xff]
    %v1212 = vld [vmem:[#allocation8 + $0x158] sm:$0xff]
    %v1213 = vld [vmem:[#allocation8 + $0x160] sm:$0xff]
    %v1214 = vld [vmem:[#allocation8 + $0x168] sm:$0xff]
    %v1215 = vld [vmem:[#allocation8 + $0x170] sm:$0xff]
    %v1216 = vld [vmem:[#allocation8 + $0x178] sm:$0xff]
    %v1217 = vld [vmem:[#allocation8 + $0x180] sm:$0xff]
    %v1218 = vld [vmem:[#allocation8 + $0x188] sm:$0xff]
    %v1219 = vld [vmem:[#allocation8 + $0x190] sm:$0xff]
    %v1220 = vld [vmem:[#allocation8 + $0x198] sm:$0xff]
    %v1221 = vld [vmem:[#allocation8 + $0x1a0] sm:$0xff]
    %v1222 = vld [vmem:[#allocation8 + $0x1a8] sm:$0xff]
    %v1223 = vld [vmem:[#allocation8 + $0x1b0] sm:$0xff]
    %v1224 = vld [vmem:[#allocation8 + $0x1b8] sm:$0xff]
    %v1225 = vld [vmem:[#allocation8 + $0x1c0] sm:$0xff]
    %v1226 = vld [vmem:[#allocation8 + $0x1c8] sm:$0xff]
    %v1227 = vld [vmem:[#allocation8 + $0x1d0] sm:$0xff]
    %v1228 = vld [vmem:[#allocation8 + $0x1d8] sm:$0xff]
    %v1229 = vld [vmem:[#allocation8 + $0x1e0] sm:$0xff]
    %v1230 = vld [vmem:[#allocation8 + $0x1e8] sm:$0xff]
    %v1231 = vld [vmem:[#allocation8 + $0x1f0] sm:$0xff]
    %v1232 = vld [vmem:[#allocation8 + $0x1f8] sm:$0xff]
    %v1233 = vld [vmem:[%s4] sm:$0x1]
    %v1235 = vperm.slane %v1233, 0
    %1237 = vmatpush.msra.mxu0 %v1184
    %1238 = vmatpush.msra.mxu0 %v1183
    %1239 = vmatpush.msra.mxu0 %v1182
    %1240 = vmatpush.msra.mxu0 %v1181
    %1241 = vmatpush.msra.mxu0 %v1180
    %1242 = vmatpush.msra.mxu0 %v1179
    %1243 = vmatpush.msra.mxu0 %v1178
    %1244 = vmatpush.msra.mxu0 %v1177
    %1245 = vmatpush.msra.mxu0 %v1176
    %1246 = vmatpush.msra.mxu0 %v1175
    %1247 = vmatpush.msra.mxu0 %v1174
    %1248 = vmatpush.msra.mxu0 %v1173
    %1249 = vmatpush.msra.mxu0 %v1172
    %1250 = vmatpush.msra.mxu0 %v1171
    %1251 = vmatpush.msra.mxu0 %v1170
    %1252 = vmatpush.msra.mxu0 %v1169
    %1253 = vmatmul.f32.gmra.mxu0 %v1149
    %v1254 = vpop.f32.mrf.mxu0
    %v1255 = vadd.f32 %v1235, %v1254
    %1256 = vmatmul.f32.gmra.mxu0 %v1153
    %v1257 = vpop.f32.mrf.mxu0
    %v1258 = vadd.f32 %v1235, %v1257
    %1259 = vmatmul.f32.gmra.mxu0 %v1157
    %v1260 = vpop.f32.mrf.mxu0
    %v1261 = vadd.f32 %v1235, %v1260
    %1262 = vmatmul.f32.gmra.mxu0 %v1161
    %v1263 = vpop.f32.mrf.mxu0
    %v1264 = vadd.f32 %v1235, %v1263
    %1265 = vmatmul.f32.gmra.mxu0 %v1165
    %v1266 = vpop.f32.mrf.mxu0
    %v1267 = vadd.f32 %v1235, %v1266
    %1268 = vdwg.mxu0
    %1269 = vmatpush.msra.mxu0 %v1200
    %1270 = vmatpush.msra.mxu0 %v1199
    %1271 = vmatpush.msra.mxu0 %v1198
    %1272 = vmatpush.msra.mxu0 %v1197
    %1273 = vmatpush.msra.mxu0 %v1196
    %1274 = vmatpush.msra.mxu0 %v1195
    %1275 = vmatpush.msra.mxu0 %v1194
    %1276 = vmatpush.msra.mxu0 %v1193
    %1277 = vmatpush.msra.mxu0 %v1192
    %1278 = vmatpush.msra.mxu0 %v1191
    %1279 = vmatpush.msra.mxu0 %v1190
    %1280 = vmatpush.msra.mxu0 %v1189
    %1281 = vmatpush.msra.mxu0 %v1188
    %1282 = vmatpush.msra.mxu0 %v1187
    %1283 = vmatpush.msra.mxu0 %v1186
    %1284 = vmatpush.msra.mxu0 %v1185
    %1285 = vmatmul.f32.gmra.mxu0 %v1150
    %v1286 = vpop.f32.mrf.mxu0
    %v1287 = vadd.f32 %v1255, %v1286
    %1288 = vmatmul.f32.gmra.mxu0 %v1154
    %v1289 = vpop.f32.mrf.mxu0
    %v1290 = vadd.f32 %v1258, %v1289
    %1291 = vmatmul.f32.gmra.mxu0 %v1158
    %v1292 = vpop.f32.mrf.mxu0
    %v1293 = vadd.f32 %v1261, %v1292
    %1294 = vmatmul.f32.gmra.mxu0 %v1162
    %v1295 = vpop.f32.mrf.mxu0
    %v1296 = vadd.f32 %v1264, %v1295
    %1297 = vmatmul.f32.gmra.mxu0 %v1166
    %v1298 = vpop.f32.mrf.mxu0
    %v1299 = vadd.f32 %v1267, %v1298
    %1300 = vdwg.mxu0
    %1301 = vmatpush.msra.mxu0 %v1216
    %1302 = vmatpush.msra.mxu0 %v1215
    %1303 = vmatpush.msra.mxu0 %v1214
    %1304 = vmatpush.msra.mxu0 %v1213
    %1305 = vmatpush.msra.mxu0 %v1212
    %1306 = vmatpush.msra.mxu0 %v1211
    %1307 = vmatpush.msra.mxu0 %v1210
    %1308 = vmatpush.msra.mxu0 %v1209
    %1309 = vmatpush.msra.mxu0 %v1208
    %1310 = vmatpush.msra.mxu0 %v1207
    %1311 = vmatpush.msra.mxu0 %v1206
    %1312 = vmatpush.msra.mxu0 %v1205
    %1313 = vmatpush.msra.mxu0 %v1204
    %1314 = vmatpush.msra.mxu0 %v1203
    %1315 = vmatpush.msra.mxu0 %v1202
    %1316 = vmatpush.msra.mxu0 %v1201
    %1317 = vmatmul.f32.gmra.mxu0 %v1151
    %v1318 = vpop.f32.mrf.mxu0
    %v1319 = vadd.f32 %v1287, %v1318
    %1320 = vmatmul.f32.gmra.mxu0 %v1155
    %v1321 = vpop.f32.mrf.mxu0
    %v1322 = vadd.f32 %v1290, %v1321
    %1323 = vmatmul.f32.gmra.mxu0 %v1159
    %v1324 = vpop.f32.mrf.mxu0
    %v1325 = vadd.f32 %v1293, %v1324
    %1326 = vmatmul.f32.gmra.mxu0 %v1163
    %v1327 = vpop.f32.mrf.mxu0
    %v1328 = vadd.f32 %v1296, %v1327
    %1329 = vmatmul.f32.gmra.mxu0 %v1167
    %v1330 = vpop.f32.mrf.mxu0
    %v1331 = vadd.f32 %v1299, %v1330
    %1332 = vdwg.mxu0
    %1333 = vmatpush.msra.mxu0 %v1232
    %1334 = vmatpush.msra.mxu0 %v1231
    %1335 = vmatpush.msra.mxu0 %v1230
    %1336 = vmatpush.msra.mxu0 %v1229
    %1337 = vmatpush.msra.mxu0 %v1228
    %1338 = vmatpush.msra.mxu0 %v1227
    %1339 = vmatpush.msra.mxu0 %v1226
    %1340 = vmatpush.msra.mxu0 %v1225
    %1341 = vmatpush.msra.mxu0 %v1224
    %1342 = vmatpush.msra.mxu0 %v1223
    %1343 = vmatpush.msra.mxu0 %v1222
    %1344 = vmatpush.msra.mxu0 %v1221
    %1345 = vmatpush.msra.mxu0 %v1220
    %1346 = vmatpush.msra.mxu0 %v1219
    %1347 = vmatpush.msra.mxu0 %v1218
    %1348 = vmatpush.msra.mxu0 %v1217
    %1349 = vmatmul.f32.gmra.mxu0 %v1152
    %v1350 = vpop.f32.mrf.mxu0
    %v1351 = vadd.f32 %v1319, %v1350
    %1352 = vmatmul.f32.gmra.mxu0 %v1156
    %v1353 = vpop.f32.mrf.mxu0
    %v1354 = vadd.f32 %v1322, %v1353
    %1355 = vmatmul.f32.gmra.mxu0 %v1160
    %v1356 = vpop.f32.mrf.mxu0
    %v1357 = vadd.f32 %v1325, %v1356
    %1358 = vmatmul.f32.gmra.mxu0 %v1164
    %v1359 = vpop.f32.mrf.mxu0
    %v1360 = vadd.f32 %v1328, %v1359
    %1361 = vmatmul.f32.gmra.mxu0 %v1168
    %v1362 = vpop.f32.mrf.mxu0
    %v1363 = vadd.f32 %v1331, %v1362
    %1364 = vdwg.mxu0
    %1365 = vst [vmem:[#allocation10] sm:$0xff] %v1351
    %1366 = vst [vmem:[#allocation10 + $0x8] sm:$0xff] %v1354
    %1367 = vst [vmem:[#allocation10 + $0x10] sm:$0xff] %v1357
    %1368 = vst [vmem:[#allocation10 + $0x18] sm:$0xff] %v1360
    %1369 = vst [vmem:[#allocation10 + $0x20] sm:$0x3] %v1363
    // Predicated region
    $region38: #{tpu_custom_call.1} parent=1 // pred_check
      _
    $region39: #{tpu_custom_call.1} parent=1 // pred_check_branch
      %1371 = sbr.rel (0) target = $region41
    $region40: #{tpu_custom_call.1} parent=1 // pred_region
      %1373 = vsyncadd [#allocation4], 0
      %s1374 = sshll.u32 [#allocation10], 4
      %s1375 = int_to_ptr.vmem [resolvable:$true] %s1374
      %s1376 = sshll.u32 %s5, 4
      %s1377 = int_to_ptr.hbm [resolvable:$true] %s1376
      %1382 = dma.vmem_to_hbm [thread:$0]  %s1375, 640, %s1377, [#allocation4], 128, 128, 8
    $region41: #{tpu_custom_call.1} parent=1 // pred_fallthru
      _
    // Predicated region
    $region42: #{tpu_custom_call.1} parent=1 // pred_check
      _
    $region43: #{tpu_custom_call.1} parent=1 // pred_check_branch
      %1384 = sbr.rel (0) target = $region45
    $region44: #{tpu_custom_call.1} parent=1 // pred_region
      %1386 = dma.done [#allocation4], 640
    $region45: #{tpu_custom_call.1} parent=1 // pred_fallthru
      _
    %1387 = vsyncpa [#allocation3], 1
    %1388 = vsyncpa [#allocation6], 1
    %1389 = vsyncpa [#allocation9], 1
    %1390 = vsyncpa [#allocation4], 1

</llo_original>
